<compile_context>
chip_gen: v7x
topology: tpu7x:2x2x1
jax: 0.10.0
libtpu: 0.0.40
codegen_flags: <defaults>
</compile_context>

<pallas_src>
import numpy as np
import jax
import jax.numpy as jnp
from jax.experimental import pallas as pl
from jax.experimental.pallas import tpu as pltpu

EPS = 1e-5


# ----------------------------------------------------------------------------
# Tiling helpers
# ----------------------------------------------------------------------------
def _vmem_config():
    """(vmem_limit_bytes, kernel-1 working-set budget), generation aware."""
    try:
        cap = int(pltpu.get_tpu_info().vmem_capacity_bytes)
    except Exception:
        cap = 0
    if cap >= 96 * 1024 * 1024:           # v5e / v6e: 128 MiB physical VMEM
        return 96 * 1024 * 1024, 64 * 1024 * 1024
    # v7x (64 MiB physical) or unknown: stay conservative
    return 40 * 1024 * 1024, 26 * 1024 * 1024


def _largest_mult8_divisor(n, cap):
    t = min(cap, n)
    t -= t % 8
    while t >= 8:
        if n % t == 0:
            return t
        t -= 8
    return None


def _pick_tm(M, K9, C4, budget):
    """Kernel-1 M tile: largest divisor of M (multiple of 8) whose working set fits."""
    per_row = 2 * K9 * 2 + 2 * C4 * 2                 # bf16 X + bf16 y, double-buffered
    fixed = K9 * C4 * 2 + 4 * C4 * 4 + (256 << 10)    # weight (grid-constant) + stats + slack
    cap = max(8, (budget - fixed) // max(per_row, 1))
    cap = min(cap, 4096)
    if M >= 16:                                       # prefer >=2 tiles: v7x has 2 TensorCores
        tm = _largest_mult8_divisor(M, min(cap, M // 2))
        if tm is not None:
            return tm
    tm = _largest_mult8_divisor(M, cap)
    return tm if tm is not None else M


def _pick_tr(NH, W, Cout):
    """Kernel-2 row block: largest divisor of N*H with <=1 MiB of logical data / buffer."""
    cap = max(1, (1 << 20) // max(W * 2 * Cout * 2, 1))
    cap = min(cap, NH)
    d = cap
    while d >= 1:
        if NH % d == 0:
            return d
        d -= 1
    return 1


# ----------------------------------------------------------------------------
# Kernel 1: fused (all-4-parity) ConvTranspose matmul + BN statistics
# ----------------------------------------------------------------------------
def convt_stats_kernel(x_ref, w_ref, y_ref, stat_ref):
    acc = jnp.dot(x_ref[...], w_ref[...], preferred_element_type=jnp.float32)
    y_ref[...] = acc.astype(y_ref.dtype)                  # bf16 writeback
    s = jnp.sum(acc, axis=0, keepdims=True)               # (1, 4*Cout), from f32 acc
    ss = jnp.sum(acc * acc, axis=0, keepdims=True)        # (1, 4*Cout)
    stat_ref[0] = jnp.concatenate([s, ss], axis=0)        # (2, 4*Cout)


# ----------------------------------------------------------------------------
# Kernel 2: BatchNorm + ReLU with parity de-interleave folded into the output index_map
# ----------------------------------------------------------------------------
def bn_relu_interleave_kernel(y_ref, scale_ref, shift_ref, o_ref):
    y = y_ref[...].astype(jnp.float32)                    # (TR, W, 2, Cout)
    o = jnp.maximum(y * scale_ref[...] + shift_ref[...], 0.0)
    o_ref[...] = o.astype(o_ref.dtype)


# (parity, input shift) -> kernel tap index, per spatial axis.
_TAP = {(0, 0): 1, (0, -1): 3, (1, 1): 0, (1, 0): 2}


def unet_decoder_forward(inputs_nchw, skip_nchw, weight, bias, gamma, beta):
    """weight: (Cin, Cout, 4, 4), exactly as torch ConvTranspose2d stores it."""
    del bias  # cancelled exactly by training-mode BatchNorm's mean subtraction
    N, Cin, H, W = inputs_nchw.shape
    Cout = weight.shape[1]
    M = N * H * W
    NH = N * H
    K9 = 9 * Cin
    C4 = 4 * Cout
    vmem_limit, budget = _vmem_config()

    # ---- 9-shift im2col shared by all 4 parities; bf16 BEFORE the 9x blowup -------------
    x = jnp.transpose(inputs_nchw, (0, 2, 3, 1)).astype(jnp.bfloat16)      # NHWC bf16
    xpad = jnp.pad(x, ((0, 0), (1, 1), (1, 1), (0, 0)))
    shifts = [xpad[:, 1 + dy:1 + dy + H, 1 + dx:1 + dx + W, :]
              for dy in (-1, 0, 1) for dx in (-1, 0, 1)]
    x9 = jnp.concatenate(shifts, axis=-1).reshape(M, K9)
    # TODO(synk): build the 9 taps inside kernel 1 from a halo'd NHWC tile
    # (memory_space=pl.ANY + manual DMA) to remove this 9x LHS HBM blowup entirely.

    # ---- fused weight (9*Cin, 4*Cout): zero-padded taps, parity-major columns -----------
    wsrc = weight.astype(jnp.bfloat16)
    zeros = jnp.zeros((Cin, Cout), jnp.bfloat16)
    wblocks = []
    for dy in (-1, 0, 1):
        for dx in (-1, 0, 1):
            cols = []
            for py in (0, 1):
                for px in (0, 1):
                    ky = _TAP.get((py, dy))
                    kx = _TAP.get((px, dx))
                    cols.append(zeros if (ky is None or kx is None)
                                else wsrc[:, :, ky, kx])
            wblocks.append(jnp.concatenate(cols, axis=1))                  # (Cin, 4*Cout)
    wb = jnp.concatenate(wblocks, axis=0)                                  # (9*Cin, 4*Cout)
    # TODO(synk): for MXU-bound layers (v7x, Cin>=512) this fused weight is 56% zeros;
    # switch to 4 parity-grouped (M,4*Cin)@(4*Cin,Cout) matmuls there, and zero-pad
    # K9 / C4 to multiples of 128 / 256 for full MXU tiles at odd channel counts.

    # ---- Kernel 1: lane-dense bf16 MXU matmul + fused per-tile BN statistics ------------
    TM = _pick_tm(M, K9, C4, budget)      # divisor of M => no padded rows, exact stats
    n_tiles = M // TM
    y, stats = pl.pallas_call(
        convt_stats_kernel,
        out_shape=(jax.ShapeDtypeStruct((M, C4), jnp.bfloat16),
                   jax.ShapeDtypeStruct((n_tiles, 2, C4), jnp.float32)),
        grid=(n_tiles,),
        in_specs=[pl.BlockSpec((TM, K9), lambda m: (m, 0)),
                  pl.BlockSpec((K9, C4), lambda m: (0, 0))],
        out_specs=(pl.BlockSpec((TM, C4), lambda m: (m, 0)),
                   pl.BlockSpec((1, 2, C4), lambda m: (m, 0, 0))),
        compiler_params=pltpu.CompilerParams(
            dimension_semantics=("parallel",),
            vmem_limit_bytes=vmem_limit),
    )(x9, wb)

    # ---- BN statistics -> per-channel scale/shift (tiny, folded in XLA) -----------------
    n_real = jnp.float32(4 * M)                        # N * 2H * 2W positions per channel
    sum_c = stats[:, 0, :].sum(axis=0).reshape(4, Cout).sum(axis=0)
    ssq_c = stats[:, 1, :].sum(axis=0).reshape(4, Cout).sum(axis=0)
    mean = sum_c / n_real
    var = jnp.maximum(ssq_c / n_real - mean * mean, 0.0)     # biased variance
    scale = gamma.astype(jnp.float32) * jax.lax.rsqrt(var + EPS)
    shift = beta.astype(jnp.float32) - mean * scale
    scale2 = jnp.broadcast_to(scale[None, :], (2, Cout))
    shift2 = jnp.broadcast_to(shift[None, :], (2, Cout))

    # ---- Kernel 2: BN + ReLU, parity interleave handled by the output index_map ---------
    y5 = y.reshape(NH, W, 2, 2, Cout)                  # (rows, w, py, px, c): free reshape
    TR = _pick_tr(NH, W, Cout)
    out5 = pl.pallas_call(
        bn_relu_interleave_kernel,
        out_shape=jax.ShapeDtypeStruct((NH, 2, W, 2, Cout), jnp.bfloat16),
        grid=(NH // TR, 2),
        in_specs=[pl.BlockSpec((TR, W, None, 2, Cout), lambda r, p: (r, 0, p, 0, 0)),
                  pl.BlockSpec((2, Cout), lambda r, p: (0, 0)),
                  pl.BlockSpec((2, Cout), lambda r, p: (0, 0))],
        out_specs=pl.BlockSpec((TR, None, W, 2, Cout), lambda r, p: (r, p, 0, 0, 0)),
        compiler_params=pltpu.CompilerParams(
            dimension_semantics=("parallel", "parallel"),
            vmem_limit_bytes=vmem_limit),
    )(y5, scale2, shift2)

    # ---- XLA epilogue: only the unavoidable NHWC->NCHW transpose + skip concat ----------
    conv_nhwc = out5.reshape(N, 2 * H, 2 * W, Cout)    # free reshape (already interleaved)
    conv_nchw = jnp.transpose(conv_nhwc, (0, 3, 1, 2)).astype(jnp.float32)
    out = jnp.concatenate([conv_nchw, skip_nchw.astype(jnp.float32)], axis=1)
    # TODO(synk): nn.Dropout2d skipped (drop_rate=0.0 -> self.dropout is None).
    return out


def reference_forward(x, skip, weight, bias, gamma, beta):
    """Direct-loop numpy reference of the PyTorch module (training-mode BN)."""
    x = np.asarray(x, np.float64)
    weight = np.asarray(weight, np.float64)
    N, Cin, H, W = x.shape
    Cout = weight.shape[1]
    OH, OW = 2 * H, 2 * W
    y = np.zeros((N, Cout, OH, OW), np.float64)
    for n in range(N):
        for ic in range(Cin):
            for iy in range(H):
                for ix in range(W):
                    for ky in range(4):
                        oy = 2 * iy - 1 + ky
                        if not (0 <= oy < OH):
                            continue
                        for kx in range(4):
                            ox = 2 * ix - 1 + kx
                            if 0 <= ox < OW:
                                y[n, :, oy, ox] += x[n, ic, iy, ix] * weight[ic, :, ky, kx]
    y += np.asarray(bias, np.float64)[None, :, None, None]
    mean = y.mean(axis=(0, 2, 3), keepdims=True)
    var = y.var(axis=(0, 2, 3), keepdims=True)
    y = (y - mean) / np.sqrt(var + EPS)
    y = y * np.asarray(gamma, np.float64)[None, :, None, None] \
        + np.asarray(beta, np.float64)[None, :, None, None]
    y = np.maximum(y, 0.0)
    return np.concatenate([y, np.asarray(skip, np.float64)], axis=1)


if __name__ == "__main__":
    N, Cin, Cout, H, W = 2, 8, 4, 8, 8
    Cskip = Cout

    key = jax.random.PRNGKey(0)
    k1, k2, k3, k4, k5, k6 = jax.random.split(key, 6)
    inputs = jax.random.normal(k1, (N, Cin, H, W), jnp.float32)             # NCHW
    skip = jax.random.normal(k2, (N, Cskip, 2 * H, 2 * W), jnp.float32)
    weight = 0.1 * jax.random.normal(k3, (Cin, Cout, 4, 4), jnp.float32)
    bias = 0.1 * jax.random.normal(k4, (Cout,), jnp.float32)
    gamma = 1.0 + 0.1 * jax.random.normal(k5, (Cout,), jnp.float32)
    beta = 0.1 * jax.random.normal(k6, (Cout,), jnp.float32)

    fwd = jax.jit(unet_decoder_forward)
    out = jax.block_until_ready(fwd(inputs, skip, weight, bias, gamma, beta))
    assert out.shape == (N, Cout + Cskip, 2 * H, 2 * W), out.shape

    ref = reference_forward(np.asarray(inputs), np.asarray(skip),
                            np.asarray(weight), np.asarray(bias),
                            np.asarray(gamma), np.asarray(beta))
    np.testing.assert_allclose(np.asarray(out, np.float64), ref,
                               atol=3e-2, rtol=3e-2)
    print("KERNEL_OK")
</pallas_src>

<mosaic_0001>
module attributes {stable_mosaic.version = 11 : i64} {
  func.func @convt_stats_kernel(%arg0: i32, %arg1: memref<64x72xbf16, #tpu.memory_space<vmem>>, %arg2: memref<72x16xbf16, #tpu.memory_space<vmem>>, %arg3: memref<64x16xbf16, #tpu.memory_space<vmem>>, %arg4: memref<1x2x16xf32, #tpu.memory_space<vmem>>) attributes {dimension_semantics = [#tpu.dimension_semantics<parallel>], iteration_bounds = array<i64: 2>, scalar_prefetch = 0 : i64, scratch_operands = 0 : i64, tpu.core_type = #tpu.core_type<tc>, window_params = [{transform_indices = @transform_0, window_bounds = array<i64: 64, 72>}, {pipeline_mode = #tpu.pipeline_mode<synchronous>, transform_indices = @transform_1, window_bounds = array<i64: 72, 16>}, {transform_indices = @transform_2, window_bounds = array<i64: 64, 16>}, {transform_indices = @transform_3, window_bounds = array<i64: 1, 2, 16>}]} {
    %c0 = arith.constant 0 : index
    %c0_0 = arith.constant 0 : index
    %0 = vector.load %arg1[%c0, %c0_0] : memref<64x72xbf16, #tpu.memory_space<vmem>>, vector<64x72xbf16>
    %c0_1 = arith.constant 0 : index
    %c0_2 = arith.constant 0 : index
    %1 = vector.load %arg2[%c0_1, %c0_2] : memref<72x16xbf16, #tpu.memory_space<vmem>>, vector<72x16xbf16>
    %cst = arith.constant dense<0.000000e+00> : vector<64x16xf32>
    %2 = tpu.matmul %0, %1, %cst {dimension_numbers = #tpu.dot_dimension_numbers<[1], [0], [0], [1], [0, 0, 1, 1], [], []>} : vector<64x72xbf16>, vector<72x16xbf16>, vector<64x16xf32> -> vector<64x16xf32>
    %3 = arith.truncf %2 : vector<64x16xf32> to vector<64x16xbf16>
    %c0_3 = arith.constant 0 : index
    %c0_4 = arith.constant 0 : index
    %4 = vector.load %arg3[%c0_3, %c0_4] : memref<64x16xbf16, #tpu.memory_space<vmem>>, vector<64x16xbf16>
    tpu.vector_store %arg3[%c0_3, %c0_4], %3 {strides = array<i32>} : memref<64x16xbf16, #tpu.memory_space<vmem>>, vector<64x16xbf16>,
    %cst_5 = arith.constant dense<0.000000e+00> : vector<16xf32>
    %5 = vector.multi_reduction <add>, %2, %cst_5 [0] : vector<64x16xf32> to vector<16xf32>
    %6 = vector.shape_cast %5 : vector<16xf32> to vector<1x16xf32>
    %7 = arith.mulf %2, %2 : vector<64x16xf32>
    %cst_6 = arith.constant dense<0.000000e+00> : vector<16xf32>
    %8 = vector.multi_reduction <add>, %7, %cst_6 [0] : vector<64x16xf32> to vector<16xf32>
    %9 = vector.shape_cast %8 : vector<16xf32> to vector<1x16xf32>
    %10 = tpu.concatenate %6, %9 in 0 : vector<1x16xf32>, vector<1x16xf32> -> vector<2x16xf32>
    %c0_7 = arith.constant 0 : index
    %c0_8 = arith.constant 0 : index
    %c0_9 = arith.constant 0 : index
    %11 = vector.load %arg4[%c0_7, %c0_8, %c0_9] : memref<1x2x16xf32, #tpu.memory_space<vmem>>, vector<1x2x16xf32>
    %12 = vector.shape_cast %11 : vector<1x2x16xf32> to vector<2x16xf32>
    %13 = vector.shape_cast %10 : vector<2x16xf32> to vector<1x2x16xf32>
    tpu.vector_store %arg4[%c0_7, %c0_8, %c0_9], %13 {strides = array<i32>} : memref<1x2x16xf32, #tpu.memory_space<vmem>>, vector<1x2x16xf32>,
    return
  }
  func.func @transform_0(%arg0: i32) -> (i32, i32) {
    %c0_i32 = arith.constant 0 : i32
    %c0_i32_0 = arith.constant 0 : i32
    return %arg0, %c0_i32 : i32, i32
  }
  func.func @transform_1(%arg0: i32) -> (i32, i32) {
    %c0_i32 = arith.constant 0 : i32
    %c0_i32_0 = arith.constant 0 : i32
    %c0_i32_1 = arith.constant 0 : i32
    return %c0_i32, %c0_i32_0 : i32, i32
  }
  func.func @transform_2(%arg0: i32) -> (i32, i32) {
    %c0_i32 = arith.constant 0 : i32
    %c0_i32_0 = arith.constant 0 : i32
    return %arg0, %c0_i32 : i32, i32
  }
  func.func @transform_3(%arg0: i32) -> (i32, i32, i32) {
    %c0_i32 = arith.constant 0 : i32
    %c0_i32_0 = arith.constant 0 : i32
    %c0_i32_1 = arith.constant 0 : i32
    return %arg0, %c0_i32, %c0_i32_0 : i32, i32, i32
  }
}

module attributes {stable_mosaic.version = 11 : i64} {
  func.func @bn_relu_interleave_kernel(%arg0: i32, %arg1: i32, %arg2: memref<16x8x1x2x4xbf16, #tpu.memory_space<vmem>>, %arg3: memref<2x4xf32, #tpu.memory_space<vmem>>, %arg4: memref<2x4xf32, #tpu.memory_space<vmem>>, %arg5: memref<16x1x8x2x4xbf16, #tpu.memory_space<vmem>>) attributes {dimension_semantics = [#tpu.dimension_semantics<parallel>, #tpu.dimension_semantics<parallel>], iteration_bounds = array<i64: 1, 2>, scalar_prefetch = 0 : i64, scratch_operands = 0 : i64, tpu.core_type = #tpu.core_type<tc>, window_params = [{transform_indices = @transform_0, window_bounds = array<i64: 16, 8, 1, 2, 4>}, {pipeline_mode = #tpu.pipeline_mode<synchronous>, transform_indices = @transform_1, window_bounds = array<i64: 2, 4>}, {pipeline_mode = #tpu.pipeline_mode<synchronous>, transform_indices = @transform_2, window_bounds = array<i64: 2, 4>}, {transform_indices = @transform_3, window_bounds = array<i64: 16, 1, 8, 2, 4>}]} {
    %c0 = arith.constant 0 : index
    %c0_0 = arith.constant 0 : index
    %c0_1 = arith.constant 0 : index
    %c0_2 = arith.constant 0 : index
    %c0_3 = arith.constant 0 : index
    %0 = vector.load %arg2[%c0, %c0_0, %c0_1, %c0_2, %c0_3] : memref<16x8x1x2x4xbf16, #tpu.memory_space<vmem>>, vector<16x8x1x2x4xbf16>
    %1 = vector.shape_cast %0 : vector<16x8x1x2x4xbf16> to vector<16x8x2x4xbf16>
    %2 = arith.extf %1 : vector<16x8x2x4xbf16> to vector<16x8x2x4xf32>
    %c0_4 = arith.constant 0 : index
    %c0_5 = arith.constant 0 : index
    %3 = vector.load %arg3[%c0_4, %c0_5] : memref<2x4xf32, #tpu.memory_space<vmem>>, vector<2x4xf32>
    %4 = vector.shape_cast %3 : vector<2x4xf32> to vector<1x1x2x4xf32>
    %5 = vector.broadcast %4 : vector<1x1x2x4xf32> to vector<16x8x2x4xf32>
    %6 = arith.mulf %2, %5 : vector<16x8x2x4xf32>
    %c0_6 = arith.constant 0 : index
    %c0_7 = arith.constant 0 : index
    %7 = vector.load %arg4[%c0_6, %c0_7] : memref<2x4xf32, #tpu.memory_space<vmem>>, vector<2x4xf32>
    %8 = vector.shape_cast %7 : vector<2x4xf32> to vector<1x1x2x4xf32>
    %9 = vector.broadcast %8 : vector<1x1x2x4xf32> to vector<16x8x2x4xf32>
    %10 = arith.addf %6, %9 : vector<16x8x2x4xf32>
    %cst = arith.constant 0.000000e+00 : f32
    %11 = vector.broadcast %cst : f32 to vector<16x8x2x4xf32>
    %12 = arith.maximumf %10, %11 : vector<16x8x2x4xf32>
    %13 = arith.truncf %12 : vector<16x8x2x4xf32> to vector<16x8x2x4xbf16>
    %c0_8 = arith.constant 0 : index
    %c0_9 = arith.constant 0 : index
    %c0_10 = arith.constant 0 : index
    %c0_11 = arith.constant 0 : index
    %c0_12 = arith.constant 0 : index
    %14 = vector.load %arg5[%c0_8, %c0_9, %c0_10, %c0_11, %c0_12] : memref<16x1x8x2x4xbf16, #tpu.memory_space<vmem>>, vector<16x1x8x2x4xbf16>
    %15 = vector.shape_cast %14 : vector<16x1x8x2x4xbf16> to vector<16x8x2x4xbf16>
    %16 = vector.shape_cast %13 : vector<16x8x2x4xbf16> to vector<16x1x8x2x4xbf16>
    tpu.vector_store %arg5[%c0_8, %c0_9, %c0_10, %c0_11, %c0_12], %16 {strides = array<i32>} : memref<16x1x8x2x4xbf16, #tpu.memory_space<vmem>>, vector<16x1x8x2x4xbf16>,
    return
  }
  func.func @transform_0(%arg0: i32, %arg1: i32) -> (i32, i32, i32, i32, i32) {
    %c0_i32 = arith.constant 0 : i32
    %c0_i32_0 = arith.constant 0 : i32
    %c0_i32_1 = arith.constant 0 : i32
    %c0_i32_2 = arith.constant 0 : i32
    return %arg0, %c0_i32, %arg1, %c0_i32_0, %c0_i32_1 : i32, i32, i32, i32, i32
  }
  func.func @transform_1(%arg0: i32, %arg1: i32) -> (i32, i32) {
    %c0_i32 = arith.constant 0 : i32
    %c0_i32_0 = arith.constant 0 : i32
    %c0_i32_1 = arith.constant 0 : i32
    return %c0_i32, %c0_i32_0 : i32, i32
  }
  func.func @transform_2(%arg0: i32, %arg1: i32) -> (i32, i32) {
    %c0_i32 = arith.constant 0 : i32
    %c0_i32_0 = arith.constant 0 : i32
    %c0_i32_1 = arith.constant 0 : i32
    return %c0_i32, %c0_i32_0 : i32, i32
  }
  func.func @transform_3(%arg0: i32, %arg1: i32) -> (i32, i32, i32, i32, i32) {
    %c0_i32 = arith.constant 0 : i32
    %c0_i32_0 = arith.constant 0 : i32
    %c0_i32_1 = arith.constant 0 : i32
    %c0_i32_2 = arith.constant 0 : i32
    return %arg0, %arg1, %c0_i32, %c0_i32_0, %c0_i32_1 : i32, i32, i32, i32, i32
  }
}

</mosaic_0001>

<llo_original>
// kernel: unet_decoder_forward.2
$region0: #{unet_decoder_forward.2}
  #allocation0 [shape = 'u32[]', space=smem, size = 0x4, offset = 0x4, fixed_abs, tag = 'smem constant byte address 0x4 - core index']
  #allocation1 [shape = 'u32[144,128]{1,0:T(1,128)}', space=vmem, size = 0x12000, scoped, tag = 'internal scratch']
  %s0 = inlined_call_operand.vmem [shape: bf16[128,72], index: 0, kind: input, shape index: {}]
  %s1 = inlined_call_operand.vmem [shape: bf16[72,16], index: 1, kind: input, shape index: {}]
  %s2 = inlined_call_operand.vmem [shape: bf16[128,16], index: 2, kind: output, shape index: {0}]
  %s3 = inlined_call_operand.vmem [shape: f32[2,2,16], index: 3, kind: output, shape index: {1}]
  %4 = xla_tuple %s2, %s3
  %s5 = sld [smem:[#allocation0]]
  $region49: #{unet_decoder_forward.2} parent=0
    _
  %s7 = ssub.s32 1, %s5
  %s8 = scalar_select 0, %s7, %s5
  loop: start=0, step=1, limit=4
  $region2: #{unet_decoder_forward.2} parent=0 // loop_pre_header
    _
  $region3: #{unet_decoder_forward.2} parent=0 // loop_header
    %s10 = sphi 0, %s14
    %p11 = scmp.ge.s32.totalorder %s10, 4
    %s20 = sphi 0, %s22
    %s23 = sphi 0, %s20
    %s24 = sphi 0, %s23
    %s40 = sphi 0, %s24
    %s44 = sphi 0, %s44
    %s46 = sphi 0, %s44
    %s47 = sphi 0, %s46
    %s61 = sphi 0, %s47
    %s67 = sphi 0, %s69
    %s70 = sphi 0, %s67
    %s71 = sphi 0, %s70
    %s87 = sphi 0, %s71
    %s93 = sphi 0, %s95
    %s96 = sphi 0, %s93
    %s97 = sphi 0, %s96
    %s113 = sphi 0, %s97
  $region4: #{unet_decoder_forward.2} parent=0 // loop_header_branch
    %13 = sbr.rel (%p11) target = $region8
  $region5: #{unet_decoder_forward.2} parent=0 // loop_body
    %s15 = ssub.s32 %s10, 1
    %s16 = ssub.s32 %s10, 2
    %s17 = sadd.s32 %s10, 1
    %s18 = ssub.s32 %s10, %s17
    %p19 = scmp.eq.s32.totalorder %s18, 0
    %s21 = sadd.s32 %s20, 1
    %s22 = scalar_select %p19, %s20, %s21
    %p25 = pneg %p19
    %p26 = scmp.eq.s32.totalorder %s10, 1
    %p27 = por %p25, %p26
    %p28 = scmp.ne.s32.totalorder %s20, %s23
    %p29 = scmp.eq.s32.totalorder %s10, 0
    %p30 = por %p28, %p29
    %p31 = scmp.ne.s32.totalorder %s20, %s23
    %p32 = scmp.eq.s32.totalorder %s15, 1
    %p33 = por %p31, %p32
    %p34 = scmp.ne.s32.totalorder %s23, %s24
    %p35 = scmp.eq.s32.totalorder %s15, 0
    %p36 = por %p34, %p35
    %p37 = scmp.ne.s32.totalorder %s23, %s24
    %p38 = scmp.eq.s32.totalorder %s16, 1
    %p39 = por %p37, %p38
    %p41 = scmp.ne.s32.totalorder %s24, %s40
    %p42 = scmp.eq.s32.totalorder %s16, 0
    %p43 = por %p41, %p42
    %s45 = sadd.s32 %s44, 1
    %p48 = scmp.eq.s32.totalorder %s10, 1
    %p49 = scmp.ne.s32.totalorder %s44, %s46
    %p50 = scmp.eq.s32.totalorder %s10, 0
    %p51 = por %p49, %p50
    %p52 = scmp.ne.s32.totalorder %s44, %s46
    %p53 = scmp.eq.s32.totalorder %s15, 1
    %p54 = por %p52, %p53
    %p55 = scmp.ne.s32.totalorder %s46, %s47
    %p56 = scmp.eq.s32.totalorder %s15, 0
    %p57 = por %p55, %p56
    %p58 = scmp.ne.s32.totalorder %s46, %s47
    %p59 = scmp.eq.s32.totalorder %s16, 1
    %p60 = por %p58, %p59
    %p62 = scmp.ne.s32.totalorder %s47, %s61
    %p63 = scmp.eq.s32.totalorder %s16, 0
    %p64 = por %p62, %p63
    %s65 = ssub.s32 %s10, %s17
    %p66 = scmp.eq.s32.totalorder %s65, 0
    %s68 = sadd.s32 %s67, 1
    %s69 = scalar_select %p66, %s67, %s68
    %p72 = pneg %p66
    %p73 = scmp.eq.s32.totalorder %s10, 1
    %p74 = por %p72, %p73
    %p75 = scmp.ne.s32.totalorder %s67, %s70
    %p76 = scmp.eq.s32.totalorder %s10, 0
    %p77 = por %p75, %p76
    %p78 = scmp.ne.s32.totalorder %s67, %s70
    %p79 = scmp.eq.s32.totalorder %s15, 1
    %p80 = por %p78, %p79
    %p81 = scmp.ne.s32.totalorder %s70, %s71
    %p82 = scmp.eq.s32.totalorder %s15, 0
    %p83 = por %p81, %p82
    %p84 = scmp.ne.s32.totalorder %s70, %s71
    %p85 = scmp.eq.s32.totalorder %s16, 1
    %p86 = por %p84, %p85
    %p88 = scmp.ne.s32.totalorder %s71, %s87
    %p89 = scmp.eq.s32.totalorder %s16, 0
    %p90 = por %p88, %p89
    %s91 = ssub.s32 %s10, %s17
    %p92 = scmp.eq.s32.totalorder %s91, 0
    %s94 = sadd.s32 %s93, 1
    %s95 = scalar_select %p92, %s93, %s94
    %p98 = pneg %p92
    %p99 = scmp.eq.s32.totalorder %s10, 1
    %p100 = por %p98, %p99
    %p101 = scmp.ne.s32.totalorder %s93, %s96
    %p102 = scmp.eq.s32.totalorder %s10, 0
    %p103 = por %p101, %p102
    %p104 = scmp.ne.s32.totalorder %s93, %s96
    %p105 = scmp.eq.s32.totalorder %s15, 1
    %p106 = por %p104, %p105
    %p107 = scmp.ne.s32.totalorder %s96, %s97
    %p108 = scmp.eq.s32.totalorder %s15, 0
    %p109 = por %p107, %p108
    %p110 = scmp.ne.s32.totalorder %s96, %s97
    %p111 = scmp.eq.s32.totalorder %s16, 1
    %p112 = por %p110, %p111
    %p114 = scmp.ne.s32.totalorder %s97, %s113
    %p115 = scmp.eq.s32.totalorder %s16, 0
    %p116 = por %p114, %p115
    %p117 = scmp.le.s32.totalorder 1, %s10
    %p118 = scmp.lt.s32.totalorder %s10, 3
    %p119 = pnand %p117, %p118
    %p120 = pneg %p119
    // Predicated region
    $region9: #{unet_decoder_forward.2} parent=5 // pred_check
      _
    $region10: #{unet_decoder_forward.2} parent=5 // pred_check_branch
      %122 = sbr.rel (%p119) target = $region12
    $region11: #{unet_decoder_forward.2} parent=5 // pred_region
      %s123 = ssub.s32 %s10, 1
      // Predicated region
      $region13: #{unet_decoder_forward.2} parent=11 // pred_check
        %p124 = pneg %p57
      $region14: #{unet_decoder_forward.2} parent=11 // pred_check_branch
        %126 = sbr.rel (%p124) target = $region16
      $region15: #{unet_decoder_forward.2} parent=11 // pred_region
        _
      $region16: #{unet_decoder_forward.2} parent=11 // pred_fallthru
        _
    $region12: #{unet_decoder_forward.2} parent=5 // pred_fallthru
      _
    %p127 = scmp.lt.s32.totalorder %s10, 2
    // Predicated region
    $region17: #{unet_decoder_forward.2} parent=5 // pred_check
      %p128 = pneg %p127
    $region18: #{unet_decoder_forward.2} parent=5 // pred_check_branch
      %130 = sbr.rel (%p128) target = $region20
    $region19: #{unet_decoder_forward.2} parent=5 // pred_region
      // Predicated region
      $region21: #{unet_decoder_forward.2} parent=19 // pred_check
        %p131 = pneg %p30
      $region22: #{unet_decoder_forward.2} parent=19 // pred_check_branch
        %133 = sbr.rel (%p131) target = $region24
      $region23: #{unet_decoder_forward.2} parent=19 // pred_region
        %s134 = smul.u32 8, %s10
        %p135 = scmp.lt.s32.totalorder %s134, 15
        %s136 = scalar_select %p135, %s134, 15
        %s137 = smul.addr %s136, 4
        %s138 = scalar_lea.vmem %s0, %s137
        %s139 = smul.u32 8, %s10
      $region24: #{unet_decoder_forward.2} parent=19 // pred_fallthru
        _
    $region20: #{unet_decoder_forward.2} parent=5 // pred_fallthru
      _
    %p140 = scmp.le.s32.totalorder 1, %s10
    %p141 = scmp.lt.s32.totalorder %s10, 3
    %p142 = pnand %p140, %p141
    %p143 = pneg %p142
    // Predicated region
    $region25: #{unet_decoder_forward.2} parent=5 // pred_check
      _
    $region26: #{unet_decoder_forward.2} parent=5 // pred_check_branch
      %145 = sbr.rel (%p142) target = $region28
    $region27: #{unet_decoder_forward.2} parent=5 // pred_region
      %s146 = ssub.s32 %s10, 1
      %s147 = smul.u32 8, %s15
      %p148 = scmp.lt.s32.totalorder %s147, 15
      %s149 = scalar_select %p148, %s147, 15
      %s150 = smul.addr %s149, 4
      %s151 = scalar_lea.vmem %s0, %s150
      %p152 = pneg %p36
      %p153 = pneg %p33
      %p154 = pneg %p57
      %p155 = pneg %p54
      %p156 = pneg %p83
      %p157 = pneg %p80
      %s158 = smul.u32 8, %s15
      %p159 = scmp.lt.s32.totalorder %s158, 15
      %s160 = scalar_select %p159, %s158, 15
      %s161 = smul.addr %s160, 4
      %s162 = scalar_lea.vmem %s2, %s161
      %p163 = pneg %p109
      %p164 = pneg %p106
      %p165 = scmp.lt.s32.totalorder %s15, 1
      %s166 = scalar_select %p165, %s15, 1
      %s167 = smul.addr %s166, 2
      %s168 = scalar_lea.vmem %s3, %s167
      %s169 = smul.u32 8, %s15
      %p170 = scmp.lt.s32.totalorder %s169, 15
      %s171 = scalar_select %p170, %s169, 15
      %s172 = smul.addr %s171, 4
      %s173 = scalar_lea.vmem %s0, %s172
      %s174 = smul.u32 8, %s15
      %s175 = smul.u32 8, %s15
      %p176 = scmp.lt.s32.totalorder %s175, 15
      %s177 = scalar_select %p176, %s175, 15
      %s178 = smul.addr %s177, 4
      %s179 = scalar_lea.vmem %s2, %s178
      %s180 = smul.u32 8, %s15
      %p181 = scmp.lt.s32.totalorder %s15, 1
      %s182 = scalar_select %p181, %s15, 1
      %s183 = smul.addr %s182, 2
      %s184 = scalar_lea.vmem %s3, %s183
      %v186 = vld [vmem:[%s173] sm:$0xf]
      %v187 = vld [vmem:[%s173 + $0x4] sm:$0xf]
      %v188 = vld [vmem:[%s173 + $0x8] sm:$0xf]
      %v189 = vld [vmem:[%s173 + $0xc] sm:$0xf]
      %v190 = vld [vmem:[%s173 + $0x10] sm:$0xf]
      %v191 = vld [vmem:[%s173 + $0x14] sm:$0xf]
      %v192 = vld [vmem:[%s173 + $0x18] sm:$0xf]
      %v193 = vld [vmem:[%s173 + $0x1c] sm:$0xf]
      %v194 = vld [vmem:[%s1] sm:$0xf]
      %v195 = vld [vmem:[%s1 + $0x4] sm:$0xf]
      %v196 = vld [vmem:[%s1 + $0x8] sm:$0xf]
      %v197 = vld [vmem:[%s1 + $0xc] sm:$0xf]
      %v198 = vld [vmem:[%s1 + $0x10] sm:$0xf]
      %v199 = vld [vmem:[%s1 + $0x14] sm:$0xf]
      %v200 = vld [vmem:[%s1 + $0x18] sm:$0xf]
      %v201 = vld [vmem:[%s1 + $0x1c] sm:$0xf]
      %v202 = vld [vmem:[%s1 + $0x20] sm:$0xf]
      %v211 = vunpack.c.l.b16 %v186
      %v212 = vunpack.c.l.b16 %v187
      %v213 = vunpack.c.l.b16 %v188
      %v214 = vunpack.c.l.b16 %v189
      %v215 = vunpack.c.l.b16 %v190
      %v216 = vunpack.c.l.b16 %v191
      %v217 = vunpack.c.l.b16 %v192
      %v218 = vunpack.c.l.b16 %v193
      %v219 = vpack.c.b16 %v212, %v211
      %v220 = vpack.c.b16 %v214, %v213
      %v221 = vpack.c.b16 %v216, %v215
      %v222 = vpack.c.b16 %v218, %v217
      %v232 = vunpack.c.l.b16 %v194
      %v233 = vunpack.c.l.b16 %v195
      %v234 = vunpack.c.l.b16 %v196
      %v235 = vunpack.c.l.b16 %v197
      %v236 = vunpack.c.l.b16 %v198
      %v237 = vunpack.c.l.b16 %v199
      %v238 = vunpack.c.l.b16 %v200
      %v239 = vunpack.c.l.b16 %v201
      %v240 = vunpack.c.l.b16 %v202
      %v241 = vpack.c.b16 %v233, %v232
      %v242 = vpack.c.b16 %v235, %v234
      %v243 = vpack.c.b16 %v237, %v236
      %v244 = vpack.c.b16 %v239, %v238
      %v245 = vpack.c.b16 %v240, %v240
      %vm250 = vcmask 588800
      %v252 = vsel %vm250, %v219, 0
      %v255 = vsel %vm250, %v220, 0
      %v258 = vsel %vm250, %v221, 0
      %v261 = vsel %vm250, %v222, 0
      %vm263 = vcmask 1043456
      %v265 = vsel %vm263, %v245, 0
      %267 = vmatprep.subr.bf16.mxu0 0
      %268 = vmatpush1.bf16.msra.mxu0 %v241
      %269 = vmatprep.subr.bf16.mxu0 0
      %270 = vmatpush1.bf16.msra.mxu0 %v242
      %271 = vmatprep.subr.bf16.mxu0 0
      %272 = vmatpush1.bf16.msra.mxu0 %v243
      %273 = vmatprep.subr.bf16.mxu0 0
      %274 = vmatpush1.bf16.msra.mxu0 %v244
      %275 = vmatprep.subr.bf16.mxu0 0
      %276 = vmatpush1.bf16.msra.mxu0 %v265
      %277 = vmatprep.subr.bf16.mxu0 0
      %278 = vmatpush1.bf16.msra.mxu0 0
      %279 = vmatprep.subr.bf16.mxu0 0
      %280 = vmatpush1.bf16.msra.mxu0 0
      %281 = vmatprep.subr.bf16.mxu0 0
      %282 = vmatpush1.bf16.msra.mxu0 0
      %283 = vmatprep.subr.bf16.mxu0 0
      %284 = vmatpush1.bf16.msra.mxu0 0
      %285 = vmatprep.subr.bf16.mxu0 0
      %286 = vmatpush1.bf16.msra.mxu0 0
      %287 = vmatprep.subr.bf16.mxu0 0
      %288 = vmatpush1.bf16.msra.mxu0 0
      %289 = vmatprep.subr.bf16.mxu0 0
      %290 = vmatpush1.bf16.msra.mxu0 0
      %291 = vmatprep.subr.bf16.mxu0 0
      %292 = vmatpush1.bf16.msra.mxu0 0
      %293 = vmatprep.subr.bf16.mxu0 0
      %294 = vmatpush1.bf16.msra.mxu0 0
      %295 = vmatprep.subr.bf16.mxu0 0
      %296 = vmatpush1.bf16.msra.mxu0 0
      %297 = vmatprep.subr.bf16.mxu0 0
      %298 = vmatpush1.bf16.msra.mxu0 0
      %299 = vmatprep.mubr.bf16.mxu0 0
      %300 = vmatmul.mubr.bf16.gmra.mrb[0].mxu0 %v252
      %v301 = vpop.f32.mrb[0].mxu0
      %v302 = vadd.f32 0.0, %v301
      %v303 = vpop.f32.mrb[0].mxu0
      %v304 = vpop.f32.mrb[0].mxu0
      %v305 = vadd.f32 0.0, %v304
      %v306 = vpop.f32.mrb[0].mxu0
      %307 = vmatprep.mubr.bf16.mxu0 0
      %308 = vmatmul.mubr.bf16.gmra.mrb[0].mxu0 %v255
      %v309 = vpop.f32.mrb[0].mxu0
      %v310 = vadd.f32 0.0, %v309
      %v311 = vpop.f32.mrb[0].mxu0
      %v312 = vpop.f32.mrb[0].mxu0
      %v313 = vadd.f32 0.0, %v312
      %v314 = vpop.f32.mrb[0].mxu0
      %315 = vmatprep.mubr.bf16.mxu0 0
      %316 = vmatmul.mubr.bf16.gmra.mrb[0].mxu0 %v258
      %v317 = vpop.f32.mrb[0].mxu0
      %v318 = vadd.f32 0.0, %v317
      %v319 = vpop.f32.mrb[0].mxu0
      %v320 = vpop.f32.mrb[0].mxu0
      %v321 = vadd.f32 0.0, %v320
      %v322 = vpop.f32.mrb[0].mxu0
      %323 = vmatprep.mubr.bf16.mxu0 0
      %324 = vmatmul.mubr.bf16.gmra.mrb[0].mxu0 %v261
      %v325 = vpop.f32.mrb[0].mxu0
      %v326 = vadd.f32 0.0, %v325
      %v327 = vpop.f32.mrb[0].mxu0
      %v328 = vpop.f32.mrb[0].mxu0
      %v329 = vadd.f32 0.0, %v328
      %v330 = vpop.f32.mrb[0].mxu0
      %331 = vdwg.mxu0
      %v332 = vpack.c.bf16 %v305, %v302
      %v333 = vpack.c.bf16 %v313, %v310
      %v334 = vpack.c.bf16 %v321, %v318
      %v335 = vpack.c.bf16 %v329, %v326
      %v340 = vunpack.c.l.b16 %v332
      %v341 = vunpack.c.h.b16 %v332
      %v342 = vunpack.c.l.b16 %v333
      %v343 = vunpack.c.h.b16 %v333
      %v344 = vunpack.c.l.b16 %v334
      %v345 = vunpack.c.h.b16 %v334
      %v346 = vunpack.c.l.b16 %v335
      %v347 = vunpack.c.h.b16 %v335
      %v348 = vpack.c.b16 %v340, %v340
      %v349 = vpack.c.b16 %v341, %v341
      %v350 = vpack.c.b16 %v342, %v342
      %v351 = vpack.c.b16 %v343, %v343
      %v352 = vpack.c.b16 %v344, %v344
      %v353 = vpack.c.b16 %v345, %v345
      %v354 = vpack.c.b16 %v346, %v346
      %v355 = vpack.c.b16 %v347, %v347
      %vm364 = vcmask 125952
      %365 = vst.msk [vmem:[%s179] sm:$0xf] %vm364, %v348
      %366 = vst.msk [vmem:[%s179 + $0x4] sm:$0xf] %vm364, %v349
      %367 = vst.msk [vmem:[%s179 + $0x8] sm:$0xf] %vm364, %v350
      %368 = vst.msk [vmem:[%s179 + $0xc] sm:$0xf] %vm364, %v351
      %369 = vst.msk [vmem:[%s179 + $0x10] sm:$0xf] %vm364, %v352
      %370 = vst.msk [vmem:[%s179 + $0x14] sm:$0xf] %vm364, %v353
      %371 = vst.msk [vmem:[%s179 + $0x18] sm:$0xf] %vm364, %v354
      %372 = vst.msk [vmem:[%s179 + $0x1c] sm:$0xf] %vm364, %v355
      %vm373 = vcmask 130048
      %v374 = vsel %vm373, %v302, 0.0
      %v375 = vsel %vm373, %v305, 0.0
      %v376 = vadd.f32 %v374, %v375
      %v377 = vsel %vm373, %v310, 0.0
      %v378 = vadd.f32 %v376, %v377
      %v379 = vsel %vm373, %v313, 0.0
      %v380 = vadd.f32 %v378, %v379
      %v381 = vsel %vm373, %v318, 0.0
      %v382 = vadd.f32 %v380, %v381
      %v383 = vsel %vm373, %v321, 0.0
      %v384 = vadd.f32 %v382, %v383
      %v385 = vsel %vm373, %v326, 0.0
      %v386 = vadd.f32 %v384, %v385
      %v387 = vsel %vm373, %v329, 0.0
      %v388 = vadd.f32 %v386, %v387
      %v389 = vrot.slane %v388, 4
      %v390 = vadd.f32 %v388, %v389
      %v391 = vrot.slane %v390, 2
      %v392 = vadd.f32 %v390, %v391
      %v393 = vrot.slane %v392, 1
      %v394 = vadd.f32 %v392, %v393
      %v395 = vmul.f32 %v302, %v302
      %v396 = vmul.f32 %v305, %v305
      %v397 = vmul.f32 %v310, %v310
      %v398 = vmul.f32 %v313, %v313
      %v399 = vmul.f32 %v318, %v318
      %v400 = vmul.f32 %v321, %v321
      %v401 = vmul.f32 %v326, %v326
      %v402 = vmul.f32 %v329, %v329
      %v403 = vsel %vm373, %v395, 0.0
      %v404 = vsel %vm373, %v396, 0.0
      %v405 = vadd.f32 %v403, %v404
      %v406 = vsel %vm373, %v397, 0.0
      %v407 = vadd.f32 %v405, %v406
      %v408 = vsel %vm373, %v398, 0.0
      %v409 = vadd.f32 %v407, %v408
      %v410 = vsel %vm373, %v399, 0.0
      %v411 = vadd.f32 %v409, %v410
      %v412 = vsel %vm373, %v400, 0.0
      %v413 = vadd.f32 %v411, %v412
      %v414 = vsel %vm373, %v401, 0.0
      %v415 = vadd.f32 %v413, %v414
      %v416 = vsel %vm373, %v402, 0.0
      %v417 = vadd.f32 %v415, %v416
      %v418 = vrot.slane %v417, 4
      %v419 = vadd.f32 %v417, %v418
      %v420 = vrot.slane %v419, 2
      %v421 = vadd.f32 %v419, %v420
      %v422 = vrot.slane %v421, 1
      %v423 = vadd.f32 %v421, %v422
      %vm424 = vcmask 1040384
      %v425 = vsel %vm424, %v394, %v423
      %vm426 = vcmask 123904
      %427 = vst.msk [vmem:[%s184] sm:$0x3] %vm426, %v425
      %s428 = smul.u32 8, %s15
      %p429 = scmp.lt.s32.totalorder %s428, 15
      %s430 = scalar_select %p429, %s428, 15
      %s431 = smul.addr %s430, 4
      %s432 = scalar_lea.vmem %s2, %s431
      %p433 = scmp.lt.s32.totalorder %s15, 1
      %s434 = scalar_select %p433, %s15, 1
      %s435 = smul.addr %s434, 2
      %s436 = scalar_lea.vmem %s3, %s435
      // Predicated region
      $region29: #{unet_decoder_forward.2} parent=27 // pred_check
        %p437 = pneg %p80
      $region30: #{unet_decoder_forward.2} parent=27 // pred_check_branch
        %439 = sbr.rel (%p437) target = $region32
      $region31: #{unet_decoder_forward.2} parent=27 // pred_region
        %s440 = smul.u32 8, %s15
      $region32: #{unet_decoder_forward.2} parent=27 // pred_fallthru
        _
      // Predicated region
      $region33: #{unet_decoder_forward.2} parent=27 // pred_check
        %p441 = pneg %p106
      $region34: #{unet_decoder_forward.2} parent=27 // pred_check_branch
        %443 = sbr.rel (%p441) target = $region36
      $region35: #{unet_decoder_forward.2} parent=27 // pred_region
        _
      $region36: #{unet_decoder_forward.2} parent=27 // pred_fallthru
        _
    $region28: #{unet_decoder_forward.2} parent=5 // pred_fallthru
      _
    %p444 = scmp.le.s32.totalorder 2, %s10
    // Predicated region
    $region37: #{unet_decoder_forward.2} parent=5 // pred_check
      %p445 = pneg %p444
    $region38: #{unet_decoder_forward.2} parent=5 // pred_check_branch
      %447 = sbr.rel (%p445) target = $region40
    $region39: #{unet_decoder_forward.2} parent=5 // pred_region
      %s448 = ssub.s32 %s10, 2
      // Predicated region
      $region41: #{unet_decoder_forward.2} parent=39 // pred_check
        %p449 = pneg %p86
      $region42: #{unet_decoder_forward.2} parent=39 // pred_check_branch
        %451 = sbr.rel (%p449) target = $region44
      $region43: #{unet_decoder_forward.2} parent=39 // pred_region
        %s452 = smul.u32 8, %s16
        %p453 = scmp.lt.s32.totalorder %s452, 15
        %s454 = scalar_select %p453, %s452, 15
        %s455 = smul.addr %s454, 4
        %s456 = scalar_lea.vmem %s2, %s455
      $region44: #{unet_decoder_forward.2} parent=39 // pred_fallthru
        _
      // Predicated region
      $region45: #{unet_decoder_forward.2} parent=39 // pred_check
        %p457 = pneg %p112
      $region46: #{unet_decoder_forward.2} parent=39 // pred_check_branch
        %459 = sbr.rel (%p457) target = $region48
      $region47: #{unet_decoder_forward.2} parent=39 // pred_region
        %p460 = scmp.lt.s32.totalorder %s16, 1
        %s461 = scalar_select %p460, %s16, 1
        %s462 = smul.addr %s461, 2
        %s463 = scalar_lea.vmem %s3, %s462
      $region48: #{unet_decoder_forward.2} parent=39 // pred_fallthru
        _
    $region40: #{unet_decoder_forward.2} parent=5 // pred_fallthru
      _
  $region6: #{unet_decoder_forward.2} parent=0 // loop_footer
    %s14 = sadd.s32 1, %s10
  $region7: #{unet_decoder_forward.2} parent=0 // loop_footer_branch
    %9 = sbr.rel target = $region3
  $region8: #{unet_decoder_forward.2} parent=0 // loop_exit
    _

// kernel: unet_decoder_forward.3
$region0: #{unet_decoder_forward.3}
  #allocation0 [shape = 'u32[]', space=smem, size = 0x4, offset = 0x4, fixed_abs, tag = 'smem constant byte address 0x4 - core index']
  #allocation1 [shape = 'u32[144,128]{1,0:T(1,128)}', space=vmem, size = 0x12000, scoped, tag = 'internal scratch']
  %s0 = inlined_call_operand.vmem [shape: bf16[16,8,2,2,4], index: 0, kind: input, shape index: {}]
  %s1 = inlined_call_operand.vmem [shape: f32[2,4], index: 1, kind: input, shape index: {}]
  %s2 = inlined_call_operand.vmem [shape: f32[2,4], index: 2, kind: input, shape index: {}]
  %s3 = inlined_call_operand.vmem [shape: bf16[16,2,8,2,4], index: 3, kind: output, shape index: {}]
  %s4 = sld [smem:[#allocation0]]
  $region120: #{unet_decoder_forward.3} parent=0
    _
  %s6 = ssub.s32 1, %s4
  %s7 = scalar_select 0, %s6, %s4
  $region1: #{unet_decoder_forward.3} parent=0
    #allocation2 [shape = 'u8[131072]{0}', space=vmem, size = 0x20000, scoped, tag = 'input window, operand 0']
    #allocation3 [shape = 'u8[131072]{0}', space=vmem, size = 0x20000, scoped, tag = 'output window, operand 0']
    loop: start=0, step=1, limit=4
    $region2: #{unet_decoder_forward.3} parent=1 // loop_pre_header
      _
    $region3: #{unet_decoder_forward.3} parent=1 // loop_header
      %s9 = sphi 0, %s13
      %p10 = scmp.ge.s32.totalorder %s9, 4
      %s16 = sphi 0, %s28
      %s17 = sphi 0, %s24
      %s18 = sphi 0, %s16
      %s19 = sphi 0, %s17
      %s20 = sphi 0, %s18
      %s21 = sphi 0, %s19
      %s33 = sphi 0, %s35
      %s36 = sphi 0, %s33
      %s37 = sphi 0, %s36
      %s53 = sphi 0, %s37
      %s57 = sphi 0, %s57
      %s59 = sphi 0, %s57
      %s60 = sphi 0, %s59
      %s74 = sphi 0, %s60
      %s78 = sphi 0, %s78
      %s80 = sphi 0, %s78
      %s81 = sphi 0, %s80
      %s95 = sphi 0, %s81
      %s103 = sphi 0, %s105
      %s106 = sphi 0, %s103
      %s107 = sphi 0, %s106
      %s123 = sphi 0, %s107
    $region4: #{unet_decoder_forward.3} parent=1 // loop_header_branch
      %12 = sbr.rel (%p10) target = $region8
    $region5: #{unet_decoder_forward.3} parent=1 // loop_body
      %s14 = ssub.s32 %s9, 1
      %s15 = ssub.s32 %s9, 2
      %s22 = sadd.s32 1, %s17
      %p23 = scmp.ge.s32.totalorder %s22, 2
      %s24 = scalar_select %p23, 0, %s22
      %s25 = sadd.s32 1, %s16
      %s26 = scalar_select %p23, %s25, %s16
      %p27 = scmp.ge.s32.totalorder %s26, 1
      %s28 = scalar_select %p27, 0, %s26
      %s29 = ssub.s32 %s16, %s28
      %s30 = ssub.s32 %s17, %s24
      %s31 = sor.u32 %s29, %s30
      %p32 = scmp.eq.s32.totalorder %s31, 0
      %s34 = sadd.s32 %s33, 1
      %s35 = scalar_select %p32, %s33, %s34
      %p38 = pneg %p32
      %p39 = scmp.eq.s32.totalorder %s9, 1
      %p40 = por %p38, %p39
      %p41 = scmp.ne.s32.totalorder %s33, %s36
      %p42 = scmp.eq.s32.totalorder %s9, 0
      %p43 = por %p41, %p42
      %p44 = scmp.ne.s32.totalorder %s33, %s36
      %p45 = scmp.eq.s32.totalorder %s14, 1
      %p46 = por %p44, %p45
      %p47 = scmp.ne.s32.totalorder %s36, %s37
      %p48 = scmp.eq.s32.totalorder %s14, 0
      %p49 = por %p47, %p48
      %p50 = scmp.ne.s32.totalorder %s36, %s37
      %p51 = scmp.eq.s32.totalorder %s15, 1
      %p52 = por %p50, %p51
      %p54 = scmp.ne.s32.totalorder %s37, %s53
      %p55 = scmp.eq.s32.totalorder %s15, 0
      %p56 = por %p54, %p55
      %s58 = sadd.s32 %s57, 1
      %p61 = scmp.eq.s32.totalorder %s9, 1
      %p62 = scmp.ne.s32.totalorder %s57, %s59
      %p63 = scmp.eq.s32.totalorder %s9, 0
      %p64 = por %p62, %p63
      %p65 = scmp.ne.s32.totalorder %s57, %s59
      %p66 = scmp.eq.s32.totalorder %s14, 1
      %p67 = por %p65, %p66
      %p68 = scmp.ne.s32.totalorder %s59, %s60
      %p69 = scmp.eq.s32.totalorder %s14, 0
      %p70 = por %p68, %p69
      %p71 = scmp.ne.s32.totalorder %s59, %s60
      %p72 = scmp.eq.s32.totalorder %s15, 1
      %p73 = por %p71, %p72
      %p75 = scmp.ne.s32.totalorder %s60, %s74
      %p76 = scmp.eq.s32.totalorder %s15, 0
      %p77 = por %p75, %p76
      %s79 = sadd.s32 %s78, 1
      %p82 = scmp.eq.s32.totalorder %s9, 1
      %p83 = scmp.ne.s32.totalorder %s78, %s80
      %p84 = scmp.eq.s32.totalorder %s9, 0
      %p85 = por %p83, %p84
      %p86 = scmp.ne.s32.totalorder %s78, %s80
      %p87 = scmp.eq.s32.totalorder %s14, 1
      %p88 = por %p86, %p87
      %p89 = scmp.ne.s32.totalorder %s80, %s81
      %p90 = scmp.eq.s32.totalorder %s14, 0
      %p91 = por %p89, %p90
      %p92 = scmp.ne.s32.totalorder %s80, %s81
      %p93 = scmp.eq.s32.totalorder %s15, 1
      %p94 = por %p92, %p93
      %p96 = scmp.ne.s32.totalorder %s81, %s95
      %p97 = scmp.eq.s32.totalorder %s15, 0
      %p98 = por %p96, %p97
      %s99 = ssub.s32 %s16, %s28
      %s100 = ssub.s32 %s17, %s24
      %s101 = sor.u32 %s99, %s100
      %p102 = scmp.eq.s32.totalorder %s101, 0
      %s104 = sadd.s32 %s103, 1
      %s105 = scalar_select %p102, %s103, %s104
      %p108 = pneg %p102
      %p109 = scmp.eq.s32.totalorder %s9, 1
      %p110 = por %p108, %p109
      %p111 = scmp.ne.s32.totalorder %s103, %s106
      %p112 = scmp.eq.s32.totalorder %s9, 0
      %p113 = por %p111, %p112
      %p114 = scmp.ne.s32.totalorder %s103, %s106
      %p115 = scmp.eq.s32.totalorder %s14, 1
      %p116 = por %p114, %p115
      %p117 = scmp.ne.s32.totalorder %s106, %s107
      %p118 = scmp.eq.s32.totalorder %s14, 0
      %p119 = por %p117, %p118
      %p120 = scmp.ne.s32.totalorder %s106, %s107
      %p121 = scmp.eq.s32.totalorder %s15, 1
      %p122 = por %p120, %p121
      %p124 = scmp.ne.s32.totalorder %s107, %s123
      %p125 = scmp.eq.s32.totalorder %s15, 0
      %p126 = por %p124, %p125
      %p127 = scmp.le.s32.totalorder 1, %s9
      %p128 = scmp.lt.s32.totalorder %s9, 3
      %p129 = pnand %p127, %p128
      %p130 = pneg %p129
      // Predicated region
      $region9: #{unet_decoder_forward.3} parent=5 // pred_check
        _
      $region10: #{unet_decoder_forward.3} parent=5 // pred_check_branch
        %132 = sbr.rel (%p129) target = $region12
      $region11: #{unet_decoder_forward.3} parent=5 // pred_region
        %s133 = ssub.s32 %s9, 1
        // Predicated region
        $region13: #{unet_decoder_forward.3} parent=11 // pred_check
          %p134 = pneg %p70
        $region14: #{unet_decoder_forward.3} parent=11 // pred_check_branch
          %136 = sbr.rel (%p134) target = $region16
        $region15: #{unet_decoder_forward.3} parent=11 // pred_region
          _
        $region16: #{unet_decoder_forward.3} parent=11 // pred_fallthru
          _
        // Predicated region
        $region17: #{unet_decoder_forward.3} parent=11 // pred_check
          %p137 = pneg %p91
        $region18: #{unet_decoder_forward.3} parent=11 // pred_check_branch
          %139 = sbr.rel (%p137) target = $region20
        $region19: #{unet_decoder_forward.3} parent=11 // pred_region
          _
        $region20: #{unet_decoder_forward.3} parent=11 // pred_fallthru
          _
      $region12: #{unet_decoder_forward.3} parent=5 // pred_fallthru
        _
      %p140 = scmp.lt.s32.totalorder %s9, 2
      // Predicated region
      $region21: #{unet_decoder_forward.3} parent=5 // pred_check
        %p141 = pneg %p140
      $region22: #{unet_decoder_forward.3} parent=5 // pred_check_branch
        %143 = sbr.rel (%p141) target = $region24
      $region23: #{unet_decoder_forward.3} parent=5 // pred_region
        // Predicated region
        $region25: #{unet_decoder_forward.3} parent=23 // pred_check
          %p144 = pneg %p43
        $region26: #{unet_decoder_forward.3} parent=23 // pred_check_branch
          %146 = sbr.rel (%p144) target = $region28
        $region27: #{unet_decoder_forward.3} parent=23 // pred_region
          %s147 = sand.u32 %s33, 1
          %s148 = sand.u32 %s33, 1
          %s149 = smul.addr %s148, 128
          %s150 = scalar_lea.vmem [#allocation2], %s149
          %s151 = smul.u32 16, %s16
          %s152 = smul.addr %s151, 16
          %s153 = sadd.s32 %s17, %s152
          %s154 = scalar_lea.vmem %s0, %s153
          // Predicated region
          $region29: #{unet_decoder_forward.3} parent=27 // pred_check
            _
          $region30: #{unet_decoder_forward.3} parent=27 // pred_check_branch
            %156 = sbr.rel (0) target = $region32
          $region31: #{unet_decoder_forward.3} parent=27 // pred_region
            // Predicated region
            $region33: #{unet_decoder_forward.3} parent=31 // pred_check
              _
            $region34: #{unet_decoder_forward.3} parent=31 // pred_check_branch
              %158 = sbr.rel target = $region36
            $region35: #{unet_decoder_forward.3} parent=31 // pred_region
              // Predicated region
              $region48: #{unet_decoder_forward.3} parent=35 // pred_check
                _
              $region49: #{unet_decoder_forward.3} parent=35 // pred_check_branch
                %427 = sbr.rel (0) target = $region51
              $region50: #{unet_decoder_forward.3} parent=35 // pred_region
                loop: start=0, step=1, limit=1
                $region52: #{unet_decoder_forward.3} parent=50 // loop_pre_header
                  _
                $region53: #{unet_decoder_forward.3} parent=50 // loop_header
                  %s429 = sphi 0, %s433
                  %p430 = scmp.ge.s32.totalorder %s429, 1
                  %s434 = sphi %s154, %s154
                  %s435 = sphi %s150, %s150
                $region54: #{unet_decoder_forward.3} parent=50 // loop_header_branch
                  %432 = sbr.rel (%p430) target = $region58
                $region55: #{unet_decoder_forward.3} parent=50 // loop_body
                  _
                $region56: #{unet_decoder_forward.3} parent=50 // loop_footer
                  %s433 = sadd.s32 1, %s429
                $region57: #{unet_decoder_forward.3} parent=50 // loop_footer_branch
                  %428 = sbr.rel target = $region53
                $region58: #{unet_decoder_forward.3} parent=50 // loop_exit
                  _
                loop: start=0, step=1, limit=1
                $region59: #{unet_decoder_forward.3} parent=50 // loop_pre_header
                  _
                $region60: #{unet_decoder_forward.3} parent=50 // loop_header
                  %s438 = sphi 0, %s442
                  %p439 = scmp.ge.s32.totalorder %s438, 1
                  %s443 = sphi %s154, %s154
                  %s444 = sphi %s150, %s150
                $region61: #{unet_decoder_forward.3} parent=50 // loop_header_branch
                  %441 = sbr.rel (%p439) target = $region65
                $region62: #{unet_decoder_forward.3} parent=50 // loop_body
                  %v445 = vld [vmem:[%s443] sm:$0x1]
                  %446 = vst [vmem:[%s444] sm:$0x1] %v445
                  %v447 = vld [vmem:[%s443 + $0x2] sm:$0x1]
                  %448 = vst [vmem:[%s444 + $0x1] sm:$0x1] %v447
                  %v449 = vld [vmem:[%s443 + $0x4] sm:$0x1]
                  %450 = vst [vmem:[%s444 + $0x2] sm:$0x1] %v449
                  %v451 = vld [vmem:[%s443 + $0x6] sm:$0x1]
                  %452 = vst [vmem:[%s444 + $0x3] sm:$0x1] %v451
                  %v453 = vld [vmem:[%s443 + $0x8] sm:$0x1]
                  %454 = vst [vmem:[%s444 + $0x4] sm:$0x1] %v453
                  %v455 = vld [vmem:[%s443 + $0xa] sm:$0x1]
                  %456 = vst [vmem:[%s444 + $0x5] sm:$0x1] %v455
                  %v457 = vld [vmem:[%s443 + $0xc] sm:$0x1]
                  %458 = vst [vmem:[%s444 + $0x6] sm:$0x1] %v457
                  %v459 = vld [vmem:[%s443 + $0xe] sm:$0x1]
                  %460 = vst [vmem:[%s444 + $0x7] sm:$0x1] %v459
                  %v461 = vld [vmem:[%s443 + $0x10] sm:$0x1]
                  %462 = vst [vmem:[%s444 + $0x8] sm:$0x1] %v461
                  %v463 = vld [vmem:[%s443 + $0x12] sm:$0x1]
                  %464 = vst [vmem:[%s444 + $0x9] sm:$0x1] %v463
                  %v465 = vld [vmem:[%s443 + $0x14] sm:$0x1]
                  %466 = vst [vmem:[%s444 + $0xa] sm:$0x1] %v465
                  %v467 = vld [vmem:[%s443 + $0x16] sm:$0x1]
                  %468 = vst [vmem:[%s444 + $0xb] sm:$0x1] %v467
                  %v469 = vld [vmem:[%s443 + $0x18] sm:$0x1]
                  %470 = vst [vmem:[%s444 + $0xc] sm:$0x1] %v469
                  %v471 = vld [vmem:[%s443 + $0x1a] sm:$0x1]
                  %472 = vst [vmem:[%s444 + $0xd] sm:$0x1] %v471
                  %v473 = vld [vmem:[%s443 + $0x1c] sm:$0x1]
                  %474 = vst [vmem:[%s444 + $0xe] sm:$0x1] %v473
                  %v475 = vld [vmem:[%s443 + $0x1e] sm:$0x1]
                  %476 = vst [vmem:[%s444 + $0xf] sm:$0x1] %v475
                  %v477 = vld [vmem:[%s443 + $0x20] sm:$0x1]
                  %478 = vst [vmem:[%s444 + $0x10] sm:$0x1] %v477
                  %v479 = vld [vmem:[%s443 + $0x22] sm:$0x1]
                  %480 = vst [vmem:[%s444 + $0x11] sm:$0x1] %v479
                  %v481 = vld [vmem:[%s443 + $0x24] sm:$0x1]
                  %482 = vst [vmem:[%s444 + $0x12] sm:$0x1] %v481
                  %v483 = vld [vmem:[%s443 + $0x26] sm:$0x1]
                  %484 = vst [vmem:[%s444 + $0x13] sm:$0x1] %v483
                  %v485 = vld [vmem:[%s443 + $0x28] sm:$0x1]
                  %486 = vst [vmem:[%s444 + $0x14] sm:$0x1] %v485
                  %v487 = vld [vmem:[%s443 + $0x2a] sm:$0x1]
                  %488 = vst [vmem:[%s444 + $0x15] sm:$0x1] %v487
                  %v489 = vld [vmem:[%s443 + $0x2c] sm:$0x1]
                  %490 = vst [vmem:[%s444 + $0x16] sm:$0x1] %v489
                  %v491 = vld [vmem:[%s443 + $0x2e] sm:$0x1]
                  %492 = vst [vmem:[%s444 + $0x17] sm:$0x1] %v491
                  %v493 = vld [vmem:[%s443 + $0x30] sm:$0x1]
                  %494 = vst [vmem:[%s444 + $0x18] sm:$0x1] %v493
                  %v495 = vld [vmem:[%s443 + $0x32] sm:$0x1]
                  %496 = vst [vmem:[%s444 + $0x19] sm:$0x1] %v495
                  %v497 = vld [vmem:[%s443 + $0x34] sm:$0x1]
                  %498 = vst [vmem:[%s444 + $0x1a] sm:$0x1] %v497
                  %v499 = vld [vmem:[%s443 + $0x36] sm:$0x1]
                  %500 = vst [vmem:[%s444 + $0x1b] sm:$0x1] %v499
                  %v501 = vld [vmem:[%s443 + $0x38] sm:$0x1]
                  %502 = vst [vmem:[%s444 + $0x1c] sm:$0x1] %v501
                  %v503 = vld [vmem:[%s443 + $0x3a] sm:$0x1]
                  %504 = vst [vmem:[%s444 + $0x1d] sm:$0x1] %v503
                  %v505 = vld [vmem:[%s443 + $0x3c] sm:$0x1]
                  %506 = vst [vmem:[%s444 + $0x1e] sm:$0x1] %v505
                  %v507 = vld [vmem:[%s443 + $0x3e] sm:$0x1]
                  %508 = vst [vmem:[%s444 + $0x1f] sm:$0x1] %v507
                  %v509 = vld [vmem:[%s443 + $0x40] sm:$0x1]
                  %510 = vst [vmem:[%s444 + $0x20] sm:$0x1] %v509
                  %v511 = vld [vmem:[%s443 + $0x42] sm:$0x1]
                  %512 = vst [vmem:[%s444 + $0x21] sm:$0x1] %v511
                  %v513 = vld [vmem:[%s443 + $0x44] sm:$0x1]
                  %514 = vst [vmem:[%s444 + $0x22] sm:$0x1] %v513
                  %v515 = vld [vmem:[%s443 + $0x46] sm:$0x1]
                  %516 = vst [vmem:[%s444 + $0x23] sm:$0x1] %v515
                  %v517 = vld [vmem:[%s443 + $0x48] sm:$0x1]
                  %518 = vst [vmem:[%s444 + $0x24] sm:$0x1] %v517
                  %v519 = vld [vmem:[%s443 + $0x4a] sm:$0x1]
                  %520 = vst [vmem:[%s444 + $0x25] sm:$0x1] %v519
                  %v521 = vld [vmem:[%s443 + $0x4c] sm:$0x1]
                  %522 = vst [vmem:[%s444 + $0x26] sm:$0x1] %v521
                  %v523 = vld [vmem:[%s443 + $0x4e] sm:$0x1]
                  %524 = vst [vmem:[%s444 + $0x27] sm:$0x1] %v523
                  %v525 = vld [vmem:[%s443 + $0x50] sm:$0x1]
                  %526 = vst [vmem:[%s444 + $0x28] sm:$0x1] %v525
                  %v527 = vld [vmem:[%s443 + $0x52] sm:$0x1]
                  %528 = vst [vmem:[%s444 + $0x29] sm:$0x1] %v527
                  %v529 = vld [vmem:[%s443 + $0x54] sm:$0x1]
                  %530 = vst [vmem:[%s444 + $0x2a] sm:$0x1] %v529
                  %v531 = vld [vmem:[%s443 + $0x56] sm:$0x1]
                  %532 = vst [vmem:[%s444 + $0x2b] sm:$0x1] %v531
                  %v533 = vld [vmem:[%s443 + $0x58] sm:$0x1]
                  %534 = vst [vmem:[%s444 + $0x2c] sm:$0x1] %v533
                  %v535 = vld [vmem:[%s443 + $0x5a] sm:$0x1]
                  %536 = vst [vmem:[%s444 + $0x2d] sm:$0x1] %v535
                  %v537 = vld [vmem:[%s443 + $0x5c] sm:$0x1]
                  %538 = vst [vmem:[%s444 + $0x2e] sm:$0x1] %v537
                  %v539 = vld [vmem:[%s443 + $0x5e] sm:$0x1]
                  %540 = vst [vmem:[%s444 + $0x2f] sm:$0x1] %v539
                  %v541 = vld [vmem:[%s443 + $0x60] sm:$0x1]
                  %542 = vst [vmem:[%s444 + $0x30] sm:$0x1] %v541
                  %v543 = vld [vmem:[%s443 + $0x62] sm:$0x1]
                  %544 = vst [vmem:[%s444 + $0x31] sm:$0x1] %v543
                  %v545 = vld [vmem:[%s443 + $0x64] sm:$0x1]
                  %546 = vst [vmem:[%s444 + $0x32] sm:$0x1] %v545
                  %v547 = vld [vmem:[%s443 + $0x66] sm:$0x1]
                  %548 = vst [vmem:[%s444 + $0x33] sm:$0x1] %v547
                  %v549 = vld [vmem:[%s443 + $0x68] sm:$0x1]
                  %550 = vst [vmem:[%s444 + $0x34] sm:$0x1] %v549
                  %v551 = vld [vmem:[%s443 + $0x6a] sm:$0x1]
                  %552 = vst [vmem:[%s444 + $0x35] sm:$0x1] %v551
                  %v553 = vld [vmem:[%s443 + $0x6c] sm:$0x1]
                  %554 = vst [vmem:[%s444 + $0x36] sm:$0x1] %v553
                  %v555 = vld [vmem:[%s443 + $0x6e] sm:$0x1]
                  %556 = vst [vmem:[%s444 + $0x37] sm:$0x1] %v555
                  %v557 = vld [vmem:[%s443 + $0x70] sm:$0x1]
                  %558 = vst [vmem:[%s444 + $0x38] sm:$0x1] %v557
                  %v559 = vld [vmem:[%s443 + $0x72] sm:$0x1]
                  %560 = vst [vmem:[%s444 + $0x39] sm:$0x1] %v559
                  %v561 = vld [vmem:[%s443 + $0x74] sm:$0x1]
                  %562 = vst [vmem:[%s444 + $0x3a] sm:$0x1] %v561
                  %v563 = vld [vmem:[%s443 + $0x76] sm:$0x1]
                  %564 = vst [vmem:[%s444 + $0x3b] sm:$0x1] %v563
                  %v565 = vld [vmem:[%s443 + $0x78] sm:$0x1]
                  %566 = vst [vmem:[%s444 + $0x3c] sm:$0x1] %v565
                  %v567 = vld [vmem:[%s443 + $0x7a] sm:$0x1]
                  %568 = vst [vmem:[%s444 + $0x3d] sm:$0x1] %v567
                  %v569 = vld [vmem:[%s443 + $0x7c] sm:$0x1]
                  %570 = vst [vmem:[%s444 + $0x3e] sm:$0x1] %v569
                  %v571 = vld [vmem:[%s443 + $0x7e] sm:$0x1]
                  %572 = vst [vmem:[%s444 + $0x3f] sm:$0x1] %v571
                  %v573 = vld [vmem:[%s443 + $0x80] sm:$0x1]
                  %574 = vst [vmem:[%s444 + $0x40] sm:$0x1] %v573
                  %v575 = vld [vmem:[%s443 + $0x82] sm:$0x1]
                  %576 = vst [vmem:[%s444 + $0x41] sm:$0x1] %v575
                  %v577 = vld [vmem:[%s443 + $0x84] sm:$0x1]
                  %578 = vst [vmem:[%s444 + $0x42] sm:$0x1] %v577
                  %v579 = vld [vmem:[%s443 + $0x86] sm:$0x1]
                  %580 = vst [vmem:[%s444 + $0x43] sm:$0x1] %v579
                  %v581 = vld [vmem:[%s443 + $0x88] sm:$0x1]
                  %582 = vst [vmem:[%s444 + $0x44] sm:$0x1] %v581
                  %v583 = vld [vmem:[%s443 + $0x8a] sm:$0x1]
                  %584 = vst [vmem:[%s444 + $0x45] sm:$0x1] %v583
                  %v585 = vld [vmem:[%s443 + $0x8c] sm:$0x1]
                  %586 = vst [vmem:[%s444 + $0x46] sm:$0x1] %v585
                  %v587 = vld [vmem:[%s443 + $0x8e] sm:$0x1]
                  %588 = vst [vmem:[%s444 + $0x47] sm:$0x1] %v587
                  %v589 = vld [vmem:[%s443 + $0x90] sm:$0x1]
                  %590 = vst [vmem:[%s444 + $0x48] sm:$0x1] %v589
                  %v591 = vld [vmem:[%s443 + $0x92] sm:$0x1]
                  %592 = vst [vmem:[%s444 + $0x49] sm:$0x1] %v591
                  %v593 = vld [vmem:[%s443 + $0x94] sm:$0x1]
                  %594 = vst [vmem:[%s444 + $0x4a] sm:$0x1] %v593
                  %v595 = vld [vmem:[%s443 + $0x96] sm:$0x1]
                  %596 = vst [vmem:[%s444 + $0x4b] sm:$0x1] %v595
                  %v597 = vld [vmem:[%s443 + $0x98] sm:$0x1]
                  %598 = vst [vmem:[%s444 + $0x4c] sm:$0x1] %v597
                  %v599 = vld [vmem:[%s443 + $0x9a] sm:$0x1]
                  %600 = vst [vmem:[%s444 + $0x4d] sm:$0x1] %v599
                  %v601 = vld [vmem:[%s443 + $0x9c] sm:$0x1]
                  %602 = vst [vmem:[%s444 + $0x4e] sm:$0x1] %v601
                  %v603 = vld [vmem:[%s443 + $0x9e] sm:$0x1]
                  %604 = vst [vmem:[%s444 + $0x4f] sm:$0x1] %v603
                  %v605 = vld [vmem:[%s443 + $0xa0] sm:$0x1]
                  %606 = vst [vmem:[%s444 + $0x50] sm:$0x1] %v605
                  %v607 = vld [vmem:[%s443 + $0xa2] sm:$0x1]
                  %608 = vst [vmem:[%s444 + $0x51] sm:$0x1] %v607
                  %v609 = vld [vmem:[%s443 + $0xa4] sm:$0x1]
                  %610 = vst [vmem:[%s444 + $0x52] sm:$0x1] %v609
                  %v611 = vld [vmem:[%s443 + $0xa6] sm:$0x1]
                  %612 = vst [vmem:[%s444 + $0x53] sm:$0x1] %v611
                  %v613 = vld [vmem:[%s443 + $0xa8] sm:$0x1]
                  %614 = vst [vmem:[%s444 + $0x54] sm:$0x1] %v613
                  %v615 = vld [vmem:[%s443 + $0xaa] sm:$0x1]
                  %616 = vst [vmem:[%s444 + $0x55] sm:$0x1] %v615
                  %v617 = vld [vmem:[%s443 + $0xac] sm:$0x1]
                  %618 = vst [vmem:[%s444 + $0x56] sm:$0x1] %v617
                  %v619 = vld [vmem:[%s443 + $0xae] sm:$0x1]
                  %620 = vst [vmem:[%s444 + $0x57] sm:$0x1] %v619
                  %v621 = vld [vmem:[%s443 + $0xb0] sm:$0x1]
                  %622 = vst [vmem:[%s444 + $0x58] sm:$0x1] %v621
                  %v623 = vld [vmem:[%s443 + $0xb2] sm:$0x1]
                  %624 = vst [vmem:[%s444 + $0x59] sm:$0x1] %v623
                  %v625 = vld [vmem:[%s443 + $0xb4] sm:$0x1]
                  %626 = vst [vmem:[%s444 + $0x5a] sm:$0x1] %v625
                  %v627 = vld [vmem:[%s443 + $0xb6] sm:$0x1]
                  %628 = vst [vmem:[%s444 + $0x5b] sm:$0x1] %v627
                  %v629 = vld [vmem:[%s443 + $0xb8] sm:$0x1]
                  %630 = vst [vmem:[%s444 + $0x5c] sm:$0x1] %v629
                  %v631 = vld [vmem:[%s443 + $0xba] sm:$0x1]
                  %632 = vst [vmem:[%s444 + $0x5d] sm:$0x1] %v631
                  %v633 = vld [vmem:[%s443 + $0xbc] sm:$0x1]
                  %634 = vst [vmem:[%s444 + $0x5e] sm:$0x1] %v633
                  %v635 = vld [vmem:[%s443 + $0xbe] sm:$0x1]
                  %636 = vst [vmem:[%s444 + $0x5f] sm:$0x1] %v635
                  %v637 = vld [vmem:[%s443 + $0xc0] sm:$0x1]
                  %638 = vst [vmem:[%s444 + $0x60] sm:$0x1] %v637
                  %v639 = vld [vmem:[%s443 + $0xc2] sm:$0x1]
                  %640 = vst [vmem:[%s444 + $0x61] sm:$0x1] %v639
                  %v641 = vld [vmem:[%s443 + $0xc4] sm:$0x1]
                  %642 = vst [vmem:[%s444 + $0x62] sm:$0x1] %v641
                  %v643 = vld [vmem:[%s443 + $0xc6] sm:$0x1]
                  %644 = vst [vmem:[%s444 + $0x63] sm:$0x1] %v643
                  %v645 = vld [vmem:[%s443 + $0xc8] sm:$0x1]
                  %646 = vst [vmem:[%s444 + $0x64] sm:$0x1] %v645
                  %v647 = vld [vmem:[%s443 + $0xca] sm:$0x1]
                  %648 = vst [vmem:[%s444 + $0x65] sm:$0x1] %v647
                  %v649 = vld [vmem:[%s443 + $0xcc] sm:$0x1]
                  %650 = vst [vmem:[%s444 + $0x66] sm:$0x1] %v649
                  %v651 = vld [vmem:[%s443 + $0xce] sm:$0x1]
                  %652 = vst [vmem:[%s444 + $0x67] sm:$0x1] %v651
                  %v653 = vld [vmem:[%s443 + $0xd0] sm:$0x1]
                  %654 = vst [vmem:[%s444 + $0x68] sm:$0x1] %v653
                  %v655 = vld [vmem:[%s443 + $0xd2] sm:$0x1]
                  %656 = vst [vmem:[%s444 + $0x69] sm:$0x1] %v655
                  %v657 = vld [vmem:[%s443 + $0xd4] sm:$0x1]
                  %658 = vst [vmem:[%s444 + $0x6a] sm:$0x1] %v657
                  %v659 = vld [vmem:[%s443 + $0xd6] sm:$0x1]
                  %660 = vst [vmem:[%s444 + $0x6b] sm:$0x1] %v659
                  %v661 = vld [vmem:[%s443 + $0xd8] sm:$0x1]
                  %662 = vst [vmem:[%s444 + $0x6c] sm:$0x1] %v661
                  %v663 = vld [vmem:[%s443 + $0xda] sm:$0x1]
                  %664 = vst [vmem:[%s444 + $0x6d] sm:$0x1] %v663
                  %v665 = vld [vmem:[%s443 + $0xdc] sm:$0x1]
                  %666 = vst [vmem:[%s444 + $0x6e] sm:$0x1] %v665
                  %v667 = vld [vmem:[%s443 + $0xde] sm:$0x1]
                  %668 = vst [vmem:[%s444 + $0x6f] sm:$0x1] %v667
                  %v669 = vld [vmem:[%s443 + $0xe0] sm:$0x1]
                  %670 = vst [vmem:[%s444 + $0x70] sm:$0x1] %v669
                  %v671 = vld [vmem:[%s443 + $0xe2] sm:$0x1]
                  %672 = vst [vmem:[%s444 + $0x71] sm:$0x1] %v671
                  %v673 = vld [vmem:[%s443 + $0xe4] sm:$0x1]
                  %674 = vst [vmem:[%s444 + $0x72] sm:$0x1] %v673
                  %v675 = vld [vmem:[%s443 + $0xe6] sm:$0x1]
                  %676 = vst [vmem:[%s444 + $0x73] sm:$0x1] %v675
                  %v677 = vld [vmem:[%s443 + $0xe8] sm:$0x1]
                  %678 = vst [vmem:[%s444 + $0x74] sm:$0x1] %v677
                  %v679 = vld [vmem:[%s443 + $0xea] sm:$0x1]
                  %680 = vst [vmem:[%s444 + $0x75] sm:$0x1] %v679
                  %v681 = vld [vmem:[%s443 + $0xec] sm:$0x1]
                  %682 = vst [vmem:[%s444 + $0x76] sm:$0x1] %v681
                  %v683 = vld [vmem:[%s443 + $0xee] sm:$0x1]
                  %684 = vst [vmem:[%s444 + $0x77] sm:$0x1] %v683
                  %v685 = vld [vmem:[%s443 + $0xf0] sm:$0x1]
                  %686 = vst [vmem:[%s444 + $0x78] sm:$0x1] %v685
                  %v687 = vld [vmem:[%s443 + $0xf2] sm:$0x1]
                  %688 = vst [vmem:[%s444 + $0x79] sm:$0x1] %v687
                  %v689 = vld [vmem:[%s443 + $0xf4] sm:$0x1]
                  %690 = vst [vmem:[%s444 + $0x7a] sm:$0x1] %v689
                  %v691 = vld [vmem:[%s443 + $0xf6] sm:$0x1]
                  %692 = vst [vmem:[%s444 + $0x7b] sm:$0x1] %v691
                  %v693 = vld [vmem:[%s443 + $0xf8] sm:$0x1]
                  %694 = vst [vmem:[%s444 + $0x7c] sm:$0x1] %v693
                  %v695 = vld [vmem:[%s443 + $0xfa] sm:$0x1]
                  %696 = vst [vmem:[%s444 + $0x7d] sm:$0x1] %v695
                  %v697 = vld [vmem:[%s443 + $0xfc] sm:$0x1]
                  %698 = vst [vmem:[%s444 + $0x7e] sm:$0x1] %v697
                  %v699 = vld [vmem:[%s443 + $0xfe] sm:$0x1]
                  %700 = vst [vmem:[%s444 + $0x7f] sm:$0x1] %v699
                $region63: #{unet_decoder_forward.3} parent=50 // loop_footer
                  %s442 = sadd.s32 1, %s438
                $region64: #{unet_decoder_forward.3} parent=50 // loop_footer_branch
                  %437 = sbr.rel target = $region60
                $region65: #{unet_decoder_forward.3} parent=50 // loop_exit
                  _
              $region51: #{unet_decoder_forward.3} parent=35 // pred_fallthru
                _
            $region36: #{unet_decoder_forward.3} parent=31 // pred_fallthru
              _
            // Predicated region
            $region37: #{unet_decoder_forward.3} parent=31 // pred_check
              _
            $region38: #{unet_decoder_forward.3} parent=31 // pred_check_branch
              %160 = sbr.rel (0) target = $region40
            $region39: #{unet_decoder_forward.3} parent=31 // pred_region
              loop: start=0, step=1, limit=1
              $region41: #{unet_decoder_forward.3} parent=39 // loop_pre_header
                _
              $region42: #{unet_decoder_forward.3} parent=39 // loop_header
                %s163 = sphi 0, %s167
                %p164 = scmp.ge.s32.totalorder %s163, 1
                %s168 = sphi %s154, %s154
                %s169 = sphi %s150, %s150
              $region43: #{unet_decoder_forward.3} parent=39 // loop_header_branch
                %166 = sbr.rel (%p164) target = $region47
              $region44: #{unet_decoder_forward.3} parent=39 // loop_body
                %v170 = vld [vmem:[%s168] sm:$0x1]
                %171 = vst [vmem:[%s169] sm:$0x1] %v170
                %v172 = vld [vmem:[%s168 + $0x2] sm:$0x1]
                %173 = vst [vmem:[%s169 + $0x1] sm:$0x1] %v172
                %v174 = vld [vmem:[%s168 + $0x4] sm:$0x1]
                %175 = vst [vmem:[%s169 + $0x2] sm:$0x1] %v174
                %v176 = vld [vmem:[%s168 + $0x6] sm:$0x1]
                %177 = vst [vmem:[%s169 + $0x3] sm:$0x1] %v176
                %v178 = vld [vmem:[%s168 + $0x8] sm:$0x1]
                %179 = vst [vmem:[%s169 + $0x4] sm:$0x1] %v178
                %v180 = vld [vmem:[%s168 + $0xa] sm:$0x1]
                %181 = vst [vmem:[%s169 + $0x5] sm:$0x1] %v180
                %v182 = vld [vmem:[%s168 + $0xc] sm:$0x1]
                %183 = vst [vmem:[%s169 + $0x6] sm:$0x1] %v182
                %v184 = vld [vmem:[%s168 + $0xe] sm:$0x1]
                %185 = vst [vmem:[%s169 + $0x7] sm:$0x1] %v184
                %v186 = vld [vmem:[%s168 + $0x10] sm:$0x1]
                %187 = vst [vmem:[%s169 + $0x8] sm:$0x1] %v186
                %v188 = vld [vmem:[%s168 + $0x12] sm:$0x1]
                %189 = vst [vmem:[%s169 + $0x9] sm:$0x1] %v188
                %v190 = vld [vmem:[%s168 + $0x14] sm:$0x1]
                %191 = vst [vmem:[%s169 + $0xa] sm:$0x1] %v190
                %v192 = vld [vmem:[%s168 + $0x16] sm:$0x1]
                %193 = vst [vmem:[%s169 + $0xb] sm:$0x1] %v192
                %v194 = vld [vmem:[%s168 + $0x18] sm:$0x1]
                %195 = vst [vmem:[%s169 + $0xc] sm:$0x1] %v194
                %v196 = vld [vmem:[%s168 + $0x1a] sm:$0x1]
                %197 = vst [vmem:[%s169 + $0xd] sm:$0x1] %v196
                %v198 = vld [vmem:[%s168 + $0x1c] sm:$0x1]
                %199 = vst [vmem:[%s169 + $0xe] sm:$0x1] %v198
                %v200 = vld [vmem:[%s168 + $0x1e] sm:$0x1]
                %201 = vst [vmem:[%s169 + $0xf] sm:$0x1] %v200
                %v202 = vld [vmem:[%s168 + $0x20] sm:$0x1]
                %203 = vst [vmem:[%s169 + $0x10] sm:$0x1] %v202
                %v204 = vld [vmem:[%s168 + $0x22] sm:$0x1]
                %205 = vst [vmem:[%s169 + $0x11] sm:$0x1] %v204
                %v206 = vld [vmem:[%s168 + $0x24] sm:$0x1]
                %207 = vst [vmem:[%s169 + $0x12] sm:$0x1] %v206
                %v208 = vld [vmem:[%s168 + $0x26] sm:$0x1]
                %209 = vst [vmem:[%s169 + $0x13] sm:$0x1] %v208
                %v210 = vld [vmem:[%s168 + $0x28] sm:$0x1]
                %211 = vst [vmem:[%s169 + $0x14] sm:$0x1] %v210
                %v212 = vld [vmem:[%s168 + $0x2a] sm:$0x1]
                %213 = vst [vmem:[%s169 + $0x15] sm:$0x1] %v212
                %v214 = vld [vmem:[%s168 + $0x2c] sm:$0x1]
                %215 = vst [vmem:[%s169 + $0x16] sm:$0x1] %v214
                %v216 = vld [vmem:[%s168 + $0x2e] sm:$0x1]
                %217 = vst [vmem:[%s169 + $0x17] sm:$0x1] %v216
                %v218 = vld [vmem:[%s168 + $0x30] sm:$0x1]
                %219 = vst [vmem:[%s169 + $0x18] sm:$0x1] %v218
                %v220 = vld [vmem:[%s168 + $0x32] sm:$0x1]
                %221 = vst [vmem:[%s169 + $0x19] sm:$0x1] %v220
                %v222 = vld [vmem:[%s168 + $0x34] sm:$0x1]
                %223 = vst [vmem:[%s169 + $0x1a] sm:$0x1] %v222
                %v224 = vld [vmem:[%s168 + $0x36] sm:$0x1]
                %225 = vst [vmem:[%s169 + $0x1b] sm:$0x1] %v224
                %v226 = vld [vmem:[%s168 + $0x38] sm:$0x1]
                %227 = vst [vmem:[%s169 + $0x1c] sm:$0x1] %v226
                %v228 = vld [vmem:[%s168 + $0x3a] sm:$0x1]
                %229 = vst [vmem:[%s169 + $0x1d] sm:$0x1] %v228
                %v230 = vld [vmem:[%s168 + $0x3c] sm:$0x1]
                %231 = vst [vmem:[%s169 + $0x1e] sm:$0x1] %v230
                %v232 = vld [vmem:[%s168 + $0x3e] sm:$0x1]
                %233 = vst [vmem:[%s169 + $0x1f] sm:$0x1] %v232
                %v234 = vld [vmem:[%s168 + $0x40] sm:$0x1]
                %235 = vst [vmem:[%s169 + $0x20] sm:$0x1] %v234
                %v236 = vld [vmem:[%s168 + $0x42] sm:$0x1]
                %237 = vst [vmem:[%s169 + $0x21] sm:$0x1] %v236
                %v238 = vld [vmem:[%s168 + $0x44] sm:$0x1]
                %239 = vst [vmem:[%s169 + $0x22] sm:$0x1] %v238
                %v240 = vld [vmem:[%s168 + $0x46] sm:$0x1]
                %241 = vst [vmem:[%s169 + $0x23] sm:$0x1] %v240
                %v242 = vld [vmem:[%s168 + $0x48] sm:$0x1]
                %243 = vst [vmem:[%s169 + $0x24] sm:$0x1] %v242
                %v244 = vld [vmem:[%s168 + $0x4a] sm:$0x1]
                %245 = vst [vmem:[%s169 + $0x25] sm:$0x1] %v244
                %v246 = vld [vmem:[%s168 + $0x4c] sm:$0x1]
                %247 = vst [vmem:[%s169 + $0x26] sm:$0x1] %v246
                %v248 = vld [vmem:[%s168 + $0x4e] sm:$0x1]
                %249 = vst [vmem:[%s169 + $0x27] sm:$0x1] %v248
                %v250 = vld [vmem:[%s168 + $0x50] sm:$0x1]
                %251 = vst [vmem:[%s169 + $0x28] sm:$0x1] %v250
                %v252 = vld [vmem:[%s168 + $0x52] sm:$0x1]
                %253 = vst [vmem:[%s169 + $0x29] sm:$0x1] %v252
                %v254 = vld [vmem:[%s168 + $0x54] sm:$0x1]
                %255 = vst [vmem:[%s169 + $0x2a] sm:$0x1] %v254
                %v256 = vld [vmem:[%s168 + $0x56] sm:$0x1]
                %257 = vst [vmem:[%s169 + $0x2b] sm:$0x1] %v256
                %v258 = vld [vmem:[%s168 + $0x58] sm:$0x1]
                %259 = vst [vmem:[%s169 + $0x2c] sm:$0x1] %v258
                %v260 = vld [vmem:[%s168 + $0x5a] sm:$0x1]
                %261 = vst [vmem:[%s169 + $0x2d] sm:$0x1] %v260
                %v262 = vld [vmem:[%s168 + $0x5c] sm:$0x1]
                %263 = vst [vmem:[%s169 + $0x2e] sm:$0x1] %v262
                %v264 = vld [vmem:[%s168 + $0x5e] sm:$0x1]
                %265 = vst [vmem:[%s169 + $0x2f] sm:$0x1] %v264
                %v266 = vld [vmem:[%s168 + $0x60] sm:$0x1]
                %267 = vst [vmem:[%s169 + $0x30] sm:$0x1] %v266
                %v268 = vld [vmem:[%s168 + $0x62] sm:$0x1]
                %269 = vst [vmem:[%s169 + $0x31] sm:$0x1] %v268
                %v270 = vld [vmem:[%s168 + $0x64] sm:$0x1]
                %271 = vst [vmem:[%s169 + $0x32] sm:$0x1] %v270
                %v272 = vld [vmem:[%s168 + $0x66] sm:$0x1]
                %273 = vst [vmem:[%s169 + $0x33] sm:$0x1] %v272
                %v274 = vld [vmem:[%s168 + $0x68] sm:$0x1]
                %275 = vst [vmem:[%s169 + $0x34] sm:$0x1] %v274
                %v276 = vld [vmem:[%s168 + $0x6a] sm:$0x1]
                %277 = vst [vmem:[%s169 + $0x35] sm:$0x1] %v276
                %v278 = vld [vmem:[%s168 + $0x6c] sm:$0x1]
                %279 = vst [vmem:[%s169 + $0x36] sm:$0x1] %v278
                %v280 = vld [vmem:[%s168 + $0x6e] sm:$0x1]
                %281 = vst [vmem:[%s169 + $0x37] sm:$0x1] %v280
                %v282 = vld [vmem:[%s168 + $0x70] sm:$0x1]
                %283 = vst [vmem:[%s169 + $0x38] sm:$0x1] %v282
                %v284 = vld [vmem:[%s168 + $0x72] sm:$0x1]
                %285 = vst [vmem:[%s169 + $0x39] sm:$0x1] %v284
                %v286 = vld [vmem:[%s168 + $0x74] sm:$0x1]
                %287 = vst [vmem:[%s169 + $0x3a] sm:$0x1] %v286
                %v288 = vld [vmem:[%s168 + $0x76] sm:$0x1]
                %289 = vst [vmem:[%s169 + $0x3b] sm:$0x1] %v288
                %v290 = vld [vmem:[%s168 + $0x78] sm:$0x1]
                %291 = vst [vmem:[%s169 + $0x3c] sm:$0x1] %v290
                %v292 = vld [vmem:[%s168 + $0x7a] sm:$0x1]
                %293 = vst [vmem:[%s169 + $0x3d] sm:$0x1] %v292
                %v294 = vld [vmem:[%s168 + $0x7c] sm:$0x1]
                %295 = vst [vmem:[%s169 + $0x3e] sm:$0x1] %v294
                %v296 = vld [vmem:[%s168 + $0x7e] sm:$0x1]
                %297 = vst [vmem:[%s169 + $0x3f] sm:$0x1] %v296
                %v298 = vld [vmem:[%s168 + $0x80] sm:$0x1]
                %299 = vst [vmem:[%s169 + $0x40] sm:$0x1] %v298
                %v300 = vld [vmem:[%s168 + $0x82] sm:$0x1]
                %301 = vst [vmem:[%s169 + $0x41] sm:$0x1] %v300
                %v302 = vld [vmem:[%s168 + $0x84] sm:$0x1]
                %303 = vst [vmem:[%s169 + $0x42] sm:$0x1] %v302
                %v304 = vld [vmem:[%s168 + $0x86] sm:$0x1]
                %305 = vst [vmem:[%s169 + $0x43] sm:$0x1] %v304
                %v306 = vld [vmem:[%s168 + $0x88] sm:$0x1]
                %307 = vst [vmem:[%s169 + $0x44] sm:$0x1] %v306
                %v308 = vld [vmem:[%s168 + $0x8a] sm:$0x1]
                %309 = vst [vmem:[%s169 + $0x45] sm:$0x1] %v308
                %v310 = vld [vmem:[%s168 + $0x8c] sm:$0x1]
                %311 = vst [vmem:[%s169 + $0x46] sm:$0x1] %v310
                %v312 = vld [vmem:[%s168 + $0x8e] sm:$0x1]
                %313 = vst [vmem:[%s169 + $0x47] sm:$0x1] %v312
                %v314 = vld [vmem:[%s168 + $0x90] sm:$0x1]
                %315 = vst [vmem:[%s169 + $0x48] sm:$0x1] %v314
                %v316 = vld [vmem:[%s168 + $0x92] sm:$0x1]
                %317 = vst [vmem:[%s169 + $0x49] sm:$0x1] %v316
                %v318 = vld [vmem:[%s168 + $0x94] sm:$0x1]
                %319 = vst [vmem:[%s169 + $0x4a] sm:$0x1] %v318
                %v320 = vld [vmem:[%s168 + $0x96] sm:$0x1]
                %321 = vst [vmem:[%s169 + $0x4b] sm:$0x1] %v320
                %v322 = vld [vmem:[%s168 + $0x98] sm:$0x1]
                %323 = vst [vmem:[%s169 + $0x4c] sm:$0x1] %v322
                %v324 = vld [vmem:[%s168 + $0x9a] sm:$0x1]
                %325 = vst [vmem:[%s169 + $0x4d] sm:$0x1] %v324
                %v326 = vld [vmem:[%s168 + $0x9c] sm:$0x1]
                %327 = vst [vmem:[%s169 + $0x4e] sm:$0x1] %v326
                %v328 = vld [vmem:[%s168 + $0x9e] sm:$0x1]
                %329 = vst [vmem:[%s169 + $0x4f] sm:$0x1] %v328
                %v330 = vld [vmem:[%s168 + $0xa0] sm:$0x1]
                %331 = vst [vmem:[%s169 + $0x50] sm:$0x1] %v330
                %v332 = vld [vmem:[%s168 + $0xa2] sm:$0x1]
                %333 = vst [vmem:[%s169 + $0x51] sm:$0x1] %v332
                %v334 = vld [vmem:[%s168 + $0xa4] sm:$0x1]
                %335 = vst [vmem:[%s169 + $0x52] sm:$0x1] %v334
                %v336 = vld [vmem:[%s168 + $0xa6] sm:$0x1]
                %337 = vst [vmem:[%s169 + $0x53] sm:$0x1] %v336
                %v338 = vld [vmem:[%s168 + $0xa8] sm:$0x1]
                %339 = vst [vmem:[%s169 + $0x54] sm:$0x1] %v338
                %v340 = vld [vmem:[%s168 + $0xaa] sm:$0x1]
                %341 = vst [vmem:[%s169 + $0x55] sm:$0x1] %v340
                %v342 = vld [vmem:[%s168 + $0xac] sm:$0x1]
                %343 = vst [vmem:[%s169 + $0x56] sm:$0x1] %v342
                %v344 = vld [vmem:[%s168 + $0xae] sm:$0x1]
                %345 = vst [vmem:[%s169 + $0x57] sm:$0x1] %v344
                %v346 = vld [vmem:[%s168 + $0xb0] sm:$0x1]
                %347 = vst [vmem:[%s169 + $0x58] sm:$0x1] %v346
                %v348 = vld [vmem:[%s168 + $0xb2] sm:$0x1]
                %349 = vst [vmem:[%s169 + $0x59] sm:$0x1] %v348
                %v350 = vld [vmem:[%s168 + $0xb4] sm:$0x1]
                %351 = vst [vmem:[%s169 + $0x5a] sm:$0x1] %v350
                %v352 = vld [vmem:[%s168 + $0xb6] sm:$0x1]
                %353 = vst [vmem:[%s169 + $0x5b] sm:$0x1] %v352
                %v354 = vld [vmem:[%s168 + $0xb8] sm:$0x1]
                %355 = vst [vmem:[%s169 + $0x5c] sm:$0x1] %v354
                %v356 = vld [vmem:[%s168 + $0xba] sm:$0x1]
                %357 = vst [vmem:[%s169 + $0x5d] sm:$0x1] %v356
                %v358 = vld [vmem:[%s168 + $0xbc] sm:$0x1]
                %359 = vst [vmem:[%s169 + $0x5e] sm:$0x1] %v358
                %v360 = vld [vmem:[%s168 + $0xbe] sm:$0x1]
                %361 = vst [vmem:[%s169 + $0x5f] sm:$0x1] %v360
                %v362 = vld [vmem:[%s168 + $0xc0] sm:$0x1]
                %363 = vst [vmem:[%s169 + $0x60] sm:$0x1] %v362
                %v364 = vld [vmem:[%s168 + $0xc2] sm:$0x1]
                %365 = vst [vmem:[%s169 + $0x61] sm:$0x1] %v364
                %v366 = vld [vmem:[%s168 + $0xc4] sm:$0x1]
                %367 = vst [vmem:[%s169 + $0x62] sm:$0x1] %v366
                %v368 = vld [vmem:[%s168 + $0xc6] sm:$0x1]
                %369 = vst [vmem:[%s169 + $0x63] sm:$0x1] %v368
                %v370 = vld [vmem:[%s168 + $0xc8] sm:$0x1]
                %371 = vst [vmem:[%s169 + $0x64] sm:$0x1] %v370
                %v372 = vld [vmem:[%s168 + $0xca] sm:$0x1]
                %373 = vst [vmem:[%s169 + $0x65] sm:$0x1] %v372
                %v374 = vld [vmem:[%s168 + $0xcc] sm:$0x1]
                %375 = vst [vmem:[%s169 + $0x66] sm:$0x1] %v374
                %v376 = vld [vmem:[%s168 + $0xce] sm:$0x1]
                %377 = vst [vmem:[%s169 + $0x67] sm:$0x1] %v376
                %v378 = vld [vmem:[%s168 + $0xd0] sm:$0x1]
                %379 = vst [vmem:[%s169 + $0x68] sm:$0x1] %v378
                %v380 = vld [vmem:[%s168 + $0xd2] sm:$0x1]
                %381 = vst [vmem:[%s169 + $0x69] sm:$0x1] %v380
                %v382 = vld [vmem:[%s168 + $0xd4] sm:$0x1]
                %383 = vst [vmem:[%s169 + $0x6a] sm:$0x1] %v382
                %v384 = vld [vmem:[%s168 + $0xd6] sm:$0x1]
                %385 = vst [vmem:[%s169 + $0x6b] sm:$0x1] %v384
                %v386 = vld [vmem:[%s168 + $0xd8] sm:$0x1]
                %387 = vst [vmem:[%s169 + $0x6c] sm:$0x1] %v386
                %v388 = vld [vmem:[%s168 + $0xda] sm:$0x1]
                %389 = vst [vmem:[%s169 + $0x6d] sm:$0x1] %v388
                %v390 = vld [vmem:[%s168 + $0xdc] sm:$0x1]
                %391 = vst [vmem:[%s169 + $0x6e] sm:$0x1] %v390
                %v392 = vld [vmem:[%s168 + $0xde] sm:$0x1]
                %393 = vst [vmem:[%s169 + $0x6f] sm:$0x1] %v392
                %v394 = vld [vmem:[%s168 + $0xe0] sm:$0x1]
                %395 = vst [vmem:[%s169 + $0x70] sm:$0x1] %v394
                %v396 = vld [vmem:[%s168 + $0xe2] sm:$0x1]
                %397 = vst [vmem:[%s169 + $0x71] sm:$0x1] %v396
                %v398 = vld [vmem:[%s168 + $0xe4] sm:$0x1]
                %399 = vst [vmem:[%s169 + $0x72] sm:$0x1] %v398
                %v400 = vld [vmem:[%s168 + $0xe6] sm:$0x1]
                %401 = vst [vmem:[%s169 + $0x73] sm:$0x1] %v400
                %v402 = vld [vmem:[%s168 + $0xe8] sm:$0x1]
                %403 = vst [vmem:[%s169 + $0x74] sm:$0x1] %v402
                %v404 = vld [vmem:[%s168 + $0xea] sm:$0x1]
                %405 = vst [vmem:[%s169 + $0x75] sm:$0x1] %v404
                %v406 = vld [vmem:[%s168 + $0xec] sm:$0x1]
                %407 = vst [vmem:[%s169 + $0x76] sm:$0x1] %v406
                %v408 = vld [vmem:[%s168 + $0xee] sm:$0x1]
                %409 = vst [vmem:[%s169 + $0x77] sm:$0x1] %v408
                %v410 = vld [vmem:[%s168 + $0xf0] sm:$0x1]
                %411 = vst [vmem:[%s169 + $0x78] sm:$0x1] %v410
                %v412 = vld [vmem:[%s168 + $0xf2] sm:$0x1]
                %413 = vst [vmem:[%s169 + $0x79] sm:$0x1] %v412
                %v414 = vld [vmem:[%s168 + $0xf4] sm:$0x1]
                %415 = vst [vmem:[%s169 + $0x7a] sm:$0x1] %v414
                %v416 = vld [vmem:[%s168 + $0xf6] sm:$0x1]
                %417 = vst [vmem:[%s169 + $0x7b] sm:$0x1] %v416
                %v418 = vld [vmem:[%s168 + $0xf8] sm:$0x1]
                %419 = vst [vmem:[%s169 + $0x7c] sm:$0x1] %v418
                %v420 = vld [vmem:[%s168 + $0xfa] sm:$0x1]
                %421 = vst [vmem:[%s169 + $0x7d] sm:$0x1] %v420
                %v422 = vld [vmem:[%s168 + $0xfc] sm:$0x1]
                %423 = vst [vmem:[%s169 + $0x7e] sm:$0x1] %v422
                %v424 = vld [vmem:[%s168 + $0xfe] sm:$0x1]
                %425 = vst [vmem:[%s169 + $0x7f] sm:$0x1] %v424
              $region45: #{unet_decoder_forward.3} parent=39 // loop_footer
                %s167 = sadd.s32 1, %s163
              $region46: #{unet_decoder_forward.3} parent=39 // loop_footer_branch
                %162 = sbr.rel target = $region42
              $region47: #{unet_decoder_forward.3} parent=39 // loop_exit
                _
            $region40: #{unet_decoder_forward.3} parent=31 // pred_fallthru
              _
          $region32: #{unet_decoder_forward.3} parent=27 // pred_fallthru
            _
          %701 = vnop
        $region28: #{unet_decoder_forward.3} parent=23 // pred_fallthru
          _
      $region24: #{unet_decoder_forward.3} parent=5 // pred_fallthru
        _
      %p702 = scmp.le.s32.totalorder 1, %s9
      %p703 = scmp.lt.s32.totalorder %s9, 3
      %p704 = pnand %p702, %p703
      %p705 = pneg %p704
      // Predicated region
      $region66: #{unet_decoder_forward.3} parent=5 // pred_check
        _
      $region67: #{unet_decoder_forward.3} parent=5 // pred_check_branch
        %707 = sbr.rel (%p704) target = $region69
      $region68: #{unet_decoder_forward.3} parent=5 // pred_region
        %s708 = ssub.s32 %s9, 1
        %s709 = sand.u32 %s36, 1
        %s710 = sand.u32 %s36, 1
        %s711 = smul.addr %s710, 128
        %s712 = scalar_lea.vmem [#allocation2], %s711
        // Predicated region
        $region70: #{unet_decoder_forward.3} parent=68 // pred_check
          %p713 = pneg %p49
        $region71: #{unet_decoder_forward.3} parent=68 // pred_check_branch
          %715 = sbr.rel (%p713) target = $region73
        $region72: #{unet_decoder_forward.3} parent=68 // pred_region
          _
        $region73: #{unet_decoder_forward.3} parent=68 // pred_fallthru
          _
        %s716 = sand.u32 %s36, 1
        %s717 = sand.u32 %s36, 1
        %s718 = smul.addr %s717, 128
        %s719 = scalar_lea.vmem [#allocation2], %s718
        %p720 = pneg %p49
        %p721 = pneg %p46
        %p722 = pneg %p70
        %p723 = pneg %p67
        %p724 = pneg %p91
        %p725 = pneg %p88
        %p726 = pneg %p119
        %p727 = pneg %p116
        %s728 = sand.u32 %s106, 1
        %s729 = sand.u32 %s106, 1
        %s730 = smul.addr %s729, 128
        %s731 = scalar_lea.vmem [#allocation3], %s730
        %s732 = smul.u32 16, %s18
        %s733 = smul.u32 16, %s18
        %v734 = vld [vmem:[%s712] sm:$0x1]
        %v735 = vld [vmem:[%s712 + $0x1] sm:$0x1]
        %v736 = vld [vmem:[%s712 + $0x2] sm:$0x1]
        %v737 = vld [vmem:[%s712 + $0x3] sm:$0x1]
        %v738 = vld [vmem:[%s712 + $0x4] sm:$0x1]
        %v739 = vld [vmem:[%s712 + $0x5] sm:$0x1]
        %v740 = vld [vmem:[%s712 + $0x6] sm:$0x1]
        %v741 = vld [vmem:[%s712 + $0x7] sm:$0x1]
        %v742 = vld [vmem:[%s712 + $0x8] sm:$0x1]
        %v743 = vld [vmem:[%s712 + $0x9] sm:$0x1]
        %v744 = vld [vmem:[%s712 + $0xa] sm:$0x1]
        %v745 = vld [vmem:[%s712 + $0xb] sm:$0x1]
        %v746 = vld [vmem:[%s712 + $0xc] sm:$0x1]
        %v747 = vld [vmem:[%s712 + $0xd] sm:$0x1]
        %v748 = vld [vmem:[%s712 + $0xe] sm:$0x1]
        %v749 = vld [vmem:[%s712 + $0xf] sm:$0x1]
        %v750 = vld [vmem:[%s712 + $0x10] sm:$0x1]
        %v751 = vld [vmem:[%s712 + $0x11] sm:$0x1]
        %v752 = vld [vmem:[%s712 + $0x12] sm:$0x1]
        %v753 = vld [vmem:[%s712 + $0x13] sm:$0x1]
        %v754 = vld [vmem:[%s712 + $0x14] sm:$0x1]
        %v755 = vld [vmem:[%s712 + $0x15] sm:$0x1]
        %v756 = vld [vmem:[%s712 + $0x16] sm:$0x1]
        %v757 = vld [vmem:[%s712 + $0x17] sm:$0x1]
        %v758 = vld [vmem:[%s712 + $0x18] sm:$0x1]
        %v759 = vld [vmem:[%s712 + $0x19] sm:$0x1]
        %v760 = vld [vmem:[%s712 + $0x1a] sm:$0x1]
        %v761 = vld [vmem:[%s712 + $0x1b] sm:$0x1]
        %v762 = vld [vmem:[%s712 + $0x1c] sm:$0x1]
        %v763 = vld [vmem:[%s712 + $0x1d] sm:$0x1]
        %v764 = vld [vmem:[%s712 + $0x1e] sm:$0x1]
        %v765 = vld [vmem:[%s712 + $0x1f] sm:$0x1]
        %v766 = vld [vmem:[%s712 + $0x20] sm:$0x1]
        %v767 = vld [vmem:[%s712 + $0x21] sm:$0x1]
        %v768 = vld [vmem:[%s712 + $0x22] sm:$0x1]
        %v769 = vld [vmem:[%s712 + $0x23] sm:$0x1]
        %v770 = vld [vmem:[%s712 + $0x24] sm:$0x1]
        %v771 = vld [vmem:[%s712 + $0x25] sm:$0x1]
        %v772 = vld [vmem:[%s712 + $0x26] sm:$0x1]
        %v773 = vld [vmem:[%s712 + $0x27] sm:$0x1]
        %v774 = vld [vmem:[%s712 + $0x28] sm:$0x1]
        %v775 = vld [vmem:[%s712 + $0x29] sm:$0x1]
        %v776 = vld [vmem:[%s712 + $0x2a] sm:$0x1]
        %v777 = vld [vmem:[%s712 + $0x2b] sm:$0x1]
        %v778 = vld [vmem:[%s712 + $0x2c] sm:$0x1]
        %v779 = vld [vmem:[%s712 + $0x2d] sm:$0x1]
        %v780 = vld [vmem:[%s712 + $0x2e] sm:$0x1]
        %v781 = vld [vmem:[%s712 + $0x2f] sm:$0x1]
        %v782 = vld [vmem:[%s712 + $0x30] sm:$0x1]
        %v783 = vld [vmem:[%s712 + $0x31] sm:$0x1]
        %v784 = vld [vmem:[%s712 + $0x32] sm:$0x1]
        %v785 = vld [vmem:[%s712 + $0x33] sm:$0x1]
        %v786 = vld [vmem:[%s712 + $0x34] sm:$0x1]
        %v787 = vld [vmem:[%s712 + $0x35] sm:$0x1]
        %v788 = vld [vmem:[%s712 + $0x36] sm:$0x1]
        %v789 = vld [vmem:[%s712 + $0x37] sm:$0x1]
        %v790 = vld [vmem:[%s712 + $0x38] sm:$0x1]
        %v791 = vld [vmem:[%s712 + $0x39] sm:$0x1]
        %v792 = vld [vmem:[%s712 + $0x3a] sm:$0x1]
        %v793 = vld [vmem:[%s712 + $0x3b] sm:$0x1]
        %v794 = vld [vmem:[%s712 + $0x3c] sm:$0x1]
        %v795 = vld [vmem:[%s712 + $0x3d] sm:$0x1]
        %v796 = vld [vmem:[%s712 + $0x3e] sm:$0x1]
        %v797 = vld [vmem:[%s712 + $0x3f] sm:$0x1]
        %v798 = vld [vmem:[%s712 + $0x40] sm:$0x1]
        %v799 = vld [vmem:[%s712 + $0x41] sm:$0x1]
        %v800 = vld [vmem:[%s712 + $0x42] sm:$0x1]
        %v801 = vld [vmem:[%s712 + $0x43] sm:$0x1]
        %v802 = vld [vmem:[%s712 + $0x44] sm:$0x1]
        %v803 = vld [vmem:[%s712 + $0x45] sm:$0x1]
        %v804 = vld [vmem:[%s712 + $0x46] sm:$0x1]
        %v805 = vld [vmem:[%s712 + $0x47] sm:$0x1]
        %v806 = vld [vmem:[%s712 + $0x48] sm:$0x1]
        %v807 = vld [vmem:[%s712 + $0x49] sm:$0x1]
        %v808 = vld [vmem:[%s712 + $0x4a] sm:$0x1]
        %v809 = vld [vmem:[%s712 + $0x4b] sm:$0x1]
        %v810 = vld [vmem:[%s712 + $0x4c] sm:$0x1]
        %v811 = vld [vmem:[%s712 + $0x4d] sm:$0x1]
        %v812 = vld [vmem:[%s712 + $0x4e] sm:$0x1]
        %v813 = vld [vmem:[%s712 + $0x4f] sm:$0x1]
        %v814 = vld [vmem:[%s712 + $0x50] sm:$0x1]
        %v815 = vld [vmem:[%s712 + $0x51] sm:$0x1]
        %v816 = vld [vmem:[%s712 + $0x52] sm:$0x1]
        %v817 = vld [vmem:[%s712 + $0x53] sm:$0x1]
        %v818 = vld [vmem:[%s712 + $0x54] sm:$0x1]
        %v819 = vld [vmem:[%s712 + $0x55] sm:$0x1]
        %v820 = vld [vmem:[%s712 + $0x56] sm:$0x1]
        %v821 = vld [vmem:[%s712 + $0x57] sm:$0x1]
        %v822 = vld [vmem:[%s712 + $0x58] sm:$0x1]
        %v823 = vld [vmem:[%s712 + $0x59] sm:$0x1]
        %v824 = vld [vmem:[%s712 + $0x5a] sm:$0x1]
        %v825 = vld [vmem:[%s712 + $0x5b] sm:$0x1]
        %v826 = vld [vmem:[%s712 + $0x5c] sm:$0x1]
        %v827 = vld [vmem:[%s712 + $0x5d] sm:$0x1]
        %v828 = vld [vmem:[%s712 + $0x5e] sm:$0x1]
        %v829 = vld [vmem:[%s712 + $0x5f] sm:$0x1]
        %v830 = vld [vmem:[%s712 + $0x60] sm:$0x1]
        %v831 = vld [vmem:[%s712 + $0x61] sm:$0x1]
        %v832 = vld [vmem:[%s712 + $0x62] sm:$0x1]
        %v833 = vld [vmem:[%s712 + $0x63] sm:$0x1]
        %v834 = vld [vmem:[%s712 + $0x64] sm:$0x1]
        %v835 = vld [vmem:[%s712 + $0x65] sm:$0x1]
        %v836 = vld [vmem:[%s712 + $0x66] sm:$0x1]
        %v837 = vld [vmem:[%s712 + $0x67] sm:$0x1]
        %v838 = vld [vmem:[%s712 + $0x68] sm:$0x1]
        %v839 = vld [vmem:[%s712 + $0x69] sm:$0x1]
        %v840 = vld [vmem:[%s712 + $0x6a] sm:$0x1]
        %v841 = vld [vmem:[%s712 + $0x6b] sm:$0x1]
        %v842 = vld [vmem:[%s712 + $0x6c] sm:$0x1]
        %v843 = vld [vmem:[%s712 + $0x6d] sm:$0x1]
        %v844 = vld [vmem:[%s712 + $0x6e] sm:$0x1]
        %v845 = vld [vmem:[%s712 + $0x6f] sm:$0x1]
        %v846 = vld [vmem:[%s712 + $0x70] sm:$0x1]
        %v847 = vld [vmem:[%s712 + $0x71] sm:$0x1]
        %v848 = vld [vmem:[%s712 + $0x72] sm:$0x1]
        %v849 = vld [vmem:[%s712 + $0x73] sm:$0x1]
        %v850 = vld [vmem:[%s712 + $0x74] sm:$0x1]
        %v851 = vld [vmem:[%s712 + $0x75] sm:$0x1]
        %v852 = vld [vmem:[%s712 + $0x76] sm:$0x1]
        %v853 = vld [vmem:[%s712 + $0x77] sm:$0x1]
        %v854 = vld [vmem:[%s712 + $0x78] sm:$0x1]
        %v855 = vld [vmem:[%s712 + $0x79] sm:$0x1]
        %v856 = vld [vmem:[%s712 + $0x7a] sm:$0x1]
        %v857 = vld [vmem:[%s712 + $0x7b] sm:$0x1]
        %v858 = vld [vmem:[%s712 + $0x7c] sm:$0x1]
        %v859 = vld [vmem:[%s712 + $0x7d] sm:$0x1]
        %v860 = vld [vmem:[%s712 + $0x7e] sm:$0x1]
        %v861 = vld [vmem:[%s712 + $0x7f] sm:$0x1]
        %v862 = vunpack.c.l.bf16 %v734
        %v863 = vunpack.c.l.bf16 %v735
        %v864 = vunpack.c.l.bf16 %v736
        %v865 = vunpack.c.l.bf16 %v737
        %v866 = vunpack.c.l.bf16 %v738
        %v867 = vunpack.c.l.bf16 %v739
        %v868 = vunpack.c.l.bf16 %v740
        %v869 = vunpack.c.l.bf16 %v741
        %v870 = vunpack.c.l.bf16 %v742
        %v871 = vunpack.c.l.bf16 %v743
        %v872 = vunpack.c.l.bf16 %v744
        %v873 = vunpack.c.l.bf16 %v745
        %v874 = vunpack.c.l.bf16 %v746
        %v875 = vunpack.c.l.bf16 %v747
        %v876 = vunpack.c.l.bf16 %v748
        %v877 = vunpack.c.l.bf16 %v749
        %v878 = vunpack.c.l.bf16 %v750
        %v879 = vunpack.c.l.bf16 %v751
        %v880 = vunpack.c.l.bf16 %v752
        %v881 = vunpack.c.l.bf16 %v753
        %v882 = vunpack.c.l.bf16 %v754
        %v883 = vunpack.c.l.bf16 %v755
        %v884 = vunpack.c.l.bf16 %v756
        %v885 = vunpack.c.l.bf16 %v757
        %v886 = vunpack.c.l.bf16 %v758
        %v887 = vunpack.c.l.bf16 %v759
        %v888 = vunpack.c.l.bf16 %v760
        %v889 = vunpack.c.l.bf16 %v761
        %v890 = vunpack.c.l.bf16 %v762
        %v891 = vunpack.c.l.bf16 %v763
        %v892 = vunpack.c.l.bf16 %v764
        %v893 = vunpack.c.l.bf16 %v765
        %v894 = vunpack.c.l.bf16 %v766
        %v895 = vunpack.c.l.bf16 %v767
        %v896 = vunpack.c.l.bf16 %v768
        %v897 = vunpack.c.l.bf16 %v769
        %v898 = vunpack.c.l.bf16 %v770
        %v899 = vunpack.c.l.bf16 %v771
        %v900 = vunpack.c.l.bf16 %v772
        %v901 = vunpack.c.l.bf16 %v773
        %v902 = vunpack.c.l.bf16 %v774
        %v903 = vunpack.c.l.bf16 %v775
        %v904 = vunpack.c.l.bf16 %v776
        %v905 = vunpack.c.l.bf16 %v777
        %v906 = vunpack.c.l.bf16 %v778
        %v907 = vunpack.c.l.bf16 %v779
        %v908 = vunpack.c.l.bf16 %v780
        %v909 = vunpack.c.l.bf16 %v781
        %v910 = vunpack.c.l.bf16 %v782
        %v911 = vunpack.c.l.bf16 %v783
        %v912 = vunpack.c.l.bf16 %v784
        %v913 = vunpack.c.l.bf16 %v785
        %v914 = vunpack.c.l.bf16 %v786
        %v915 = vunpack.c.l.bf16 %v787
        %v916 = vunpack.c.l.bf16 %v788
        %v917 = vunpack.c.l.bf16 %v789
        %v918 = vunpack.c.l.bf16 %v790
        %v919 = vunpack.c.l.bf16 %v791
        %v920 = vunpack.c.l.bf16 %v792
        %v921 = vunpack.c.l.bf16 %v793
        %v922 = vunpack.c.l.bf16 %v794
        %v923 = vunpack.c.l.bf16 %v795
        %v924 = vunpack.c.l.bf16 %v796
        %v925 = vunpack.c.l.bf16 %v797
        %v926 = vunpack.c.l.bf16 %v798
        %v927 = vunpack.c.l.bf16 %v799
        %v928 = vunpack.c.l.bf16 %v800
        %v929 = vunpack.c.l.bf16 %v801
        %v930 = vunpack.c.l.bf16 %v802
        %v931 = vunpack.c.l.bf16 %v803
        %v932 = vunpack.c.l.bf16 %v804
        %v933 = vunpack.c.l.bf16 %v805
        %v934 = vunpack.c.l.bf16 %v806
        %v935 = vunpack.c.l.bf16 %v807
        %v936 = vunpack.c.l.bf16 %v808
        %v937 = vunpack.c.l.bf16 %v809
        %v938 = vunpack.c.l.bf16 %v810
        %v939 = vunpack.c.l.bf16 %v811
        %v940 = vunpack.c.l.bf16 %v812
        %v941 = vunpack.c.l.bf16 %v813
        %v942 = vunpack.c.l.bf16 %v814
        %v943 = vunpack.c.l.bf16 %v815
        %v944 = vunpack.c.l.bf16 %v816
        %v945 = vunpack.c.l.bf16 %v817
        %v946 = vunpack.c.l.bf16 %v818
        %v947 = vunpack.c.l.bf16 %v819
        %v948 = vunpack.c.l.bf16 %v820
        %v949 = vunpack.c.l.bf16 %v821
        %v950 = vunpack.c.l.bf16 %v822
        %v951 = vunpack.c.l.bf16 %v823
        %v952 = vunpack.c.l.bf16 %v824
        %v953 = vunpack.c.l.bf16 %v825
        %v954 = vunpack.c.l.bf16 %v826
        %v955 = vunpack.c.l.bf16 %v827
        %v956 = vunpack.c.l.bf16 %v828
        %v957 = vunpack.c.l.bf16 %v829
        %v958 = vunpack.c.l.bf16 %v830
        %v959 = vunpack.c.l.bf16 %v831
        %v960 = vunpack.c.l.bf16 %v832
        %v961 = vunpack.c.l.bf16 %v833
        %v962 = vunpack.c.l.bf16 %v834
        %v963 = vunpack.c.l.bf16 %v835
        %v964 = vunpack.c.l.bf16 %v836
        %v965 = vunpack.c.l.bf16 %v837
        %v966 = vunpack.c.l.bf16 %v838
        %v967 = vunpack.c.l.bf16 %v839
        %v968 = vunpack.c.l.bf16 %v840
        %v969 = vunpack.c.l.bf16 %v841
        %v970 = vunpack.c.l.bf16 %v842
        %v971 = vunpack.c.l.bf16 %v843
        %v972 = vunpack.c.l.bf16 %v844
        %v973 = vunpack.c.l.bf16 %v845
        %v974 = vunpack.c.l.bf16 %v846
        %v975 = vunpack.c.l.bf16 %v847
        %v976 = vunpack.c.l.bf16 %v848
        %v977 = vunpack.c.l.bf16 %v849
        %v978 = vunpack.c.l.bf16 %v850
        %v979 = vunpack.c.l.bf16 %v851
        %v980 = vunpack.c.l.bf16 %v852
        %v981 = vunpack.c.l.bf16 %v853
        %v982 = vunpack.c.l.bf16 %v854
        %v983 = vunpack.c.l.bf16 %v855
        %v984 = vunpack.c.l.bf16 %v856
        %v985 = vunpack.c.l.bf16 %v857
        %v986 = vunpack.c.l.bf16 %v858
        %v987 = vunpack.c.l.bf16 %v859
        %v988 = vunpack.c.l.bf16 %v860
        %v989 = vunpack.c.l.bf16 %v861
        %v990 = vld [vmem:[%s1] sm:$0x3]
        %v991 = vmul.f32 %v862, %v990
        %v992 = vmul.f32 %v863, %v990
        %v993 = vmul.f32 %v864, %v990
        %v994 = vmul.f32 %v865, %v990
        %v995 = vmul.f32 %v866, %v990
        %v996 = vmul.f32 %v867, %v990
        %v997 = vmul.f32 %v868, %v990
        %v998 = vmul.f32 %v869, %v990
        %v999 = vmul.f32 %v870, %v990
        %v1000 = vmul.f32 %v871, %v990
        %v1001 = vmul.f32 %v872, %v990
        %v1002 = vmul.f32 %v873, %v990
        %v1003 = vmul.f32 %v874, %v990
        %v1004 = vmul.f32 %v875, %v990
        %v1005 = vmul.f32 %v876, %v990
        %v1006 = vmul.f32 %v877, %v990
        %v1007 = vmul.f32 %v878, %v990
        %v1008 = vmul.f32 %v879, %v990
        %v1009 = vmul.f32 %v880, %v990
        %v1010 = vmul.f32 %v881, %v990
        %v1011 = vmul.f32 %v882, %v990
        %v1012 = vmul.f32 %v883, %v990
        %v1013 = vmul.f32 %v884, %v990
        %v1014 = vmul.f32 %v885, %v990
        %v1015 = vmul.f32 %v886, %v990
        %v1016 = vmul.f32 %v887, %v990
        %v1017 = vmul.f32 %v888, %v990
        %v1018 = vmul.f32 %v889, %v990
        %v1019 = vmul.f32 %v890, %v990
        %v1020 = vmul.f32 %v891, %v990
        %v1021 = vmul.f32 %v892, %v990
        %v1022 = vmul.f32 %v893, %v990
        %v1023 = vmul.f32 %v894, %v990
        %v1024 = vmul.f32 %v895, %v990
        %v1025 = vmul.f32 %v896, %v990
        %v1026 = vmul.f32 %v897, %v990
        %v1027 = vmul.f32 %v898, %v990
        %v1028 = vmul.f32 %v899, %v990
        %v1029 = vmul.f32 %v900, %v990
        %v1030 = vmul.f32 %v901, %v990
        %v1031 = vmul.f32 %v902, %v990
        %v1032 = vmul.f32 %v903, %v990
        %v1033 = vmul.f32 %v904, %v990
        %v1034 = vmul.f32 %v905, %v990
        %v1035 = vmul.f32 %v906, %v990
        %v1036 = vmul.f32 %v907, %v990
        %v1037 = vmul.f32 %v908, %v990
        %v1038 = vmul.f32 %v909, %v990
        %v1039 = vmul.f32 %v910, %v990
        %v1040 = vmul.f32 %v911, %v990
        %v1041 = vmul.f32 %v912, %v990
        %v1042 = vmul.f32 %v913, %v990
        %v1043 = vmul.f32 %v914, %v990
        %v1044 = vmul.f32 %v915, %v990
        %v1045 = vmul.f32 %v916, %v990
        %v1046 = vmul.f32 %v917, %v990
        %v1047 = vmul.f32 %v918, %v990
        %v1048 = vmul.f32 %v919, %v990
        %v1049 = vmul.f32 %v920, %v990
        %v1050 = vmul.f32 %v921, %v990
        %v1051 = vmul.f32 %v922, %v990
        %v1052 = vmul.f32 %v923, %v990
        %v1053 = vmul.f32 %v924, %v990
        %v1054 = vmul.f32 %v925, %v990
        %v1055 = vmul.f32 %v926, %v990
        %v1056 = vmul.f32 %v927, %v990
        %v1057 = vmul.f32 %v928, %v990
        %v1058 = vmul.f32 %v929, %v990
        %v1059 = vmul.f32 %v930, %v990
        %v1060 = vmul.f32 %v931, %v990
        %v1061 = vmul.f32 %v932, %v990
        %v1062 = vmul.f32 %v933, %v990
        %v1063 = vmul.f32 %v934, %v990
        %v1064 = vmul.f32 %v935, %v990
        %v1065 = vmul.f32 %v936, %v990
        %v1066 = vmul.f32 %v937, %v990
        %v1067 = vmul.f32 %v938, %v990
        %v1068 = vmul.f32 %v939, %v990
        %v1069 = vmul.f32 %v940, %v990
        %v1070 = vmul.f32 %v941, %v990
        %v1071 = vmul.f32 %v942, %v990
        %v1072 = vmul.f32 %v943, %v990
        %v1073 = vmul.f32 %v944, %v990
        %v1074 = vmul.f32 %v945, %v990
        %v1075 = vmul.f32 %v946, %v990
        %v1076 = vmul.f32 %v947, %v990
        %v1077 = vmul.f32 %v948, %v990
        %v1078 = vmul.f32 %v949, %v990
        %v1079 = vmul.f32 %v950, %v990
        %v1080 = vmul.f32 %v951, %v990
        %v1081 = vmul.f32 %v952, %v990
        %v1082 = vmul.f32 %v953, %v990
        %v1083 = vmul.f32 %v954, %v990
        %v1084 = vmul.f32 %v955, %v990
        %v1085 = vmul.f32 %v956, %v990
        %v1086 = vmul.f32 %v957, %v990
        %v1087 = vmul.f32 %v958, %v990
        %v1088 = vmul.f32 %v959, %v990
        %v1089 = vmul.f32 %v960, %v990
        %v1090 = vmul.f32 %v961, %v990
        %v1091 = vmul.f32 %v962, %v990
        %v1092 = vmul.f32 %v963, %v990
        %v1093 = vmul.f32 %v964, %v990
        %v1094 = vmul.f32 %v965, %v990
        %v1095 = vmul.f32 %v966, %v990
        %v1096 = vmul.f32 %v967, %v990
        %v1097 = vmul.f32 %v968, %v990
        %v1098 = vmul.f32 %v969, %v990
        %v1099 = vmul.f32 %v970, %v990
        %v1100 = vmul.f32 %v971, %v990
        %v1101 = vmul.f32 %v972, %v990
        %v1102 = vmul.f32 %v973, %v990
        %v1103 = vmul.f32 %v974, %v990
        %v1104 = vmul.f32 %v975, %v990
        %v1105 = vmul.f32 %v976, %v990
        %v1106 = vmul.f32 %v977, %v990
        %v1107 = vmul.f32 %v978, %v990
        %v1108 = vmul.f32 %v979, %v990
        %v1109 = vmul.f32 %v980, %v990
        %v1110 = vmul.f32 %v981, %v990
        %v1111 = vmul.f32 %v982, %v990
        %v1112 = vmul.f32 %v983, %v990
        %v1113 = vmul.f32 %v984, %v990
        %v1114 = vmul.f32 %v985, %v990
        %v1115 = vmul.f32 %v986, %v990
        %v1116 = vmul.f32 %v987, %v990
        %v1117 = vmul.f32 %v988, %v990
        %v1118 = vmul.f32 %v989, %v990
        %v1119 = vld [vmem:[%s2] sm:$0x3]
        %v1120 = vadd.f32 %v991, %v1119
        %v1121 = vadd.f32 %v992, %v1119
        %v1122 = vadd.f32 %v993, %v1119
        %v1123 = vadd.f32 %v994, %v1119
        %v1124 = vadd.f32 %v995, %v1119
        %v1125 = vadd.f32 %v996, %v1119
        %v1126 = vadd.f32 %v997, %v1119
        %v1127 = vadd.f32 %v998, %v1119
        %v1128 = vadd.f32 %v999, %v1119
        %v1129 = vadd.f32 %v1000, %v1119
        %v1130 = vadd.f32 %v1001, %v1119
        %v1131 = vadd.f32 %v1002, %v1119
        %v1132 = vadd.f32 %v1003, %v1119
        %v1133 = vadd.f32 %v1004, %v1119
        %v1134 = vadd.f32 %v1005, %v1119
        %v1135 = vadd.f32 %v1006, %v1119
        %v1136 = vadd.f32 %v1007, %v1119
        %v1137 = vadd.f32 %v1008, %v1119
        %v1138 = vadd.f32 %v1009, %v1119
        %v1139 = vadd.f32 %v1010, %v1119
        %v1140 = vadd.f32 %v1011, %v1119
        %v1141 = vadd.f32 %v1012, %v1119
        %v1142 = vadd.f32 %v1013, %v1119
        %v1143 = vadd.f32 %v1014, %v1119
        %v1144 = vadd.f32 %v1015, %v1119
        %v1145 = vadd.f32 %v1016, %v1119
        %v1146 = vadd.f32 %v1017, %v1119
        %v1147 = vadd.f32 %v1018, %v1119
        %v1148 = vadd.f32 %v1019, %v1119
        %v1149 = vadd.f32 %v1020, %v1119
        %v1150 = vadd.f32 %v1021, %v1119
        %v1151 = vadd.f32 %v1022, %v1119
        %v1152 = vadd.f32 %v1023, %v1119
        %v1153 = vadd.f32 %v1024, %v1119
        %v1154 = vadd.f32 %v1025, %v1119
        %v1155 = vadd.f32 %v1026, %v1119
        %v1156 = vadd.f32 %v1027, %v1119
        %v1157 = vadd.f32 %v1028, %v1119
        %v1158 = vadd.f32 %v1029, %v1119
        %v1159 = vadd.f32 %v1030, %v1119
        %v1160 = vadd.f32 %v1031, %v1119
        %v1161 = vadd.f32 %v1032, %v1119
        %v1162 = vadd.f32 %v1033, %v1119
        %v1163 = vadd.f32 %v1034, %v1119
        %v1164 = vadd.f32 %v1035, %v1119
        %v1165 = vadd.f32 %v1036, %v1119
        %v1166 = vadd.f32 %v1037, %v1119
        %v1167 = vadd.f32 %v1038, %v1119
        %v1168 = vadd.f32 %v1039, %v1119
        %v1169 = vadd.f32 %v1040, %v1119
        %v1170 = vadd.f32 %v1041, %v1119
        %v1171 = vadd.f32 %v1042, %v1119
        %v1172 = vadd.f32 %v1043, %v1119
        %v1173 = vadd.f32 %v1044, %v1119
        %v1174 = vadd.f32 %v1045, %v1119
        %v1175 = vadd.f32 %v1046, %v1119
        %v1176 = vadd.f32 %v1047, %v1119
        %v1177 = vadd.f32 %v1048, %v1119
        %v1178 = vadd.f32 %v1049, %v1119
        %v1179 = vadd.f32 %v1050, %v1119
        %v1180 = vadd.f32 %v1051, %v1119
        %v1181 = vadd.f32 %v1052, %v1119
        %v1182 = vadd.f32 %v1053, %v1119
        %v1183 = vadd.f32 %v1054, %v1119
        %v1184 = vadd.f32 %v1055, %v1119
        %v1185 = vadd.f32 %v1056, %v1119
        %v1186 = vadd.f32 %v1057, %v1119
        %v1187 = vadd.f32 %v1058, %v1119
        %v1188 = vadd.f32 %v1059, %v1119
        %v1189 = vadd.f32 %v1060, %v1119
        %v1190 = vadd.f32 %v1061, %v1119
        %v1191 = vadd.f32 %v1062, %v1119
        %v1192 = vadd.f32 %v1063, %v1119
        %v1193 = vadd.f32 %v1064, %v1119
        %v1194 = vadd.f32 %v1065, %v1119
        %v1195 = vadd.f32 %v1066, %v1119
        %v1196 = vadd.f32 %v1067, %v1119
        %v1197 = vadd.f32 %v1068, %v1119
        %v1198 = vadd.f32 %v1069, %v1119
        %v1199 = vadd.f32 %v1070, %v1119
        %v1200 = vadd.f32 %v1071, %v1119
        %v1201 = vadd.f32 %v1072, %v1119
        %v1202 = vadd.f32 %v1073, %v1119
        %v1203 = vadd.f32 %v1074, %v1119
        %v1204 = vadd.f32 %v1075, %v1119
        %v1205 = vadd.f32 %v1076, %v1119
        %v1206 = vadd.f32 %v1077, %v1119
        %v1207 = vadd.f32 %v1078, %v1119
        %v1208 = vadd.f32 %v1079, %v1119
        %v1209 = vadd.f32 %v1080, %v1119
        %v1210 = vadd.f32 %v1081, %v1119
        %v1211 = vadd.f32 %v1082, %v1119
        %v1212 = vadd.f32 %v1083, %v1119
        %v1213 = vadd.f32 %v1084, %v1119
        %v1214 = vadd.f32 %v1085, %v1119
        %v1215 = vadd.f32 %v1086, %v1119
        %v1216 = vadd.f32 %v1087, %v1119
        %v1217 = vadd.f32 %v1088, %v1119
        %v1218 = vadd.f32 %v1089, %v1119
        %v1219 = vadd.f32 %v1090, %v1119
        %v1220 = vadd.f32 %v1091, %v1119
        %v1221 = vadd.f32 %v1092, %v1119
        %v1222 = vadd.f32 %v1093, %v1119
        %v1223 = vadd.f32 %v1094, %v1119
        %v1224 = vadd.f32 %v1095, %v1119
        %v1225 = vadd.f32 %v1096, %v1119
        %v1226 = vadd.f32 %v1097, %v1119
        %v1227 = vadd.f32 %v1098, %v1119
        %v1228 = vadd.f32 %v1099, %v1119
        %v1229 = vadd.f32 %v1100, %v1119
        %v1230 = vadd.f32 %v1101, %v1119
        %v1231 = vadd.f32 %v1102, %v1119
        %v1232 = vadd.f32 %v1103, %v1119
        %v1233 = vadd.f32 %v1104, %v1119
        %v1234 = vadd.f32 %v1105, %v1119
        %v1235 = vadd.f32 %v1106, %v1119
        %v1236 = vadd.f32 %v1107, %v1119
        %v1237 = vadd.f32 %v1108, %v1119
        %v1238 = vadd.f32 %v1109, %v1119
        %v1239 = vadd.f32 %v1110, %v1119
        %v1240 = vadd.f32 %v1111, %v1119
        %v1241 = vadd.f32 %v1112, %v1119
        %v1242 = vadd.f32 %v1113, %v1119
        %v1243 = vadd.f32 %v1114, %v1119
        %v1244 = vadd.f32 %v1115, %v1119
        %v1245 = vadd.f32 %v1116, %v1119
        %v1246 = vadd.f32 %v1117, %v1119
        %v1247 = vadd.f32 %v1118, %v1119
        %v1248 = vmax.f32 %v1120, 0.0
        %v1249 = vmax.f32 %v1121, 0.0
        %v1250 = vmax.f32 %v1122, 0.0
        %v1251 = vmax.f32 %v1123, 0.0
        %v1252 = vmax.f32 %v1124, 0.0
        %v1253 = vmax.f32 %v1125, 0.0
        %v1254 = vmax.f32 %v1126, 0.0
        %v1255 = vmax.f32 %v1127, 0.0
        %v1256 = vmax.f32 %v1128, 0.0
        %v1257 = vmax.f32 %v1129, 0.0
        %v1258 = vmax.f32 %v1130, 0.0
        %v1259 = vmax.f32 %v1131, 0.0
        %v1260 = vmax.f32 %v1132, 0.0
        %v1261 = vmax.f32 %v1133, 0.0
        %v1262 = vmax.f32 %v1134, 0.0
        %v1263 = vmax.f32 %v1135, 0.0
        %v1264 = vmax.f32 %v1136, 0.0
        %v1265 = vmax.f32 %v1137, 0.0
        %v1266 = vmax.f32 %v1138, 0.0
        %v1267 = vmax.f32 %v1139, 0.0
        %v1268 = vmax.f32 %v1140, 0.0
        %v1269 = vmax.f32 %v1141, 0.0
        %v1270 = vmax.f32 %v1142, 0.0
        %v1271 = vmax.f32 %v1143, 0.0
        %v1272 = vmax.f32 %v1144, 0.0
        %v1273 = vmax.f32 %v1145, 0.0
        %v1274 = vmax.f32 %v1146, 0.0
        %v1275 = vmax.f32 %v1147, 0.0
        %v1276 = vmax.f32 %v1148, 0.0
        %v1277 = vmax.f32 %v1149, 0.0
        %v1278 = vmax.f32 %v1150, 0.0
        %v1279 = vmax.f32 %v1151, 0.0
        %v1280 = vmax.f32 %v1152, 0.0
        %v1281 = vmax.f32 %v1153, 0.0
        %v1282 = vmax.f32 %v1154, 0.0
        %v1283 = vmax.f32 %v1155, 0.0
        %v1284 = vmax.f32 %v1156, 0.0
        %v1285 = vmax.f32 %v1157, 0.0
        %v1286 = vmax.f32 %v1158, 0.0
        %v1287 = vmax.f32 %v1159, 0.0
        %v1288 = vmax.f32 %v1160, 0.0
        %v1289 = vmax.f32 %v1161, 0.0
        %v1290 = vmax.f32 %v1162, 0.0
        %v1291 = vmax.f32 %v1163, 0.0
        %v1292 = vmax.f32 %v1164, 0.0
        %v1293 = vmax.f32 %v1165, 0.0
        %v1294 = vmax.f32 %v1166, 0.0
        %v1295 = vmax.f32 %v1167, 0.0
        %v1296 = vmax.f32 %v1168, 0.0
        %v1297 = vmax.f32 %v1169, 0.0
        %v1298 = vmax.f32 %v1170, 0.0
        %v1299 = vmax.f32 %v1171, 0.0
        %v1300 = vmax.f32 %v1172, 0.0
        %v1301 = vmax.f32 %v1173, 0.0
        %v1302 = vmax.f32 %v1174, 0.0
        %v1303 = vmax.f32 %v1175, 0.0
        %v1304 = vmax.f32 %v1176, 0.0
        %v1305 = vmax.f32 %v1177, 0.0
        %v1306 = vmax.f32 %v1178, 0.0
        %v1307 = vmax.f32 %v1179, 0.0
        %v1308 = vmax.f32 %v1180, 0.0
        %v1309 = vmax.f32 %v1181, 0.0
        %v1310 = vmax.f32 %v1182, 0.0
        %v1311 = vmax.f32 %v1183, 0.0
        %v1312 = vmax.f32 %v1184, 0.0
        %v1313 = vmax.f32 %v1185, 0.0
        %v1314 = vmax.f32 %v1186, 0.0
        %v1315 = vmax.f32 %v1187, 0.0
        %v1316 = vmax.f32 %v1188, 0.0
        %v1317 = vmax.f32 %v1189, 0.0
        %v1318 = vmax.f32 %v1190, 0.0
        %v1319 = vmax.f32 %v1191, 0.0
        %v1320 = vmax.f32 %v1192, 0.0
        %v1321 = vmax.f32 %v1193, 0.0
        %v1322 = vmax.f32 %v1194, 0.0
        %v1323 = vmax.f32 %v1195, 0.0
        %v1324 = vmax.f32 %v1196, 0.0
        %v1325 = vmax.f32 %v1197, 0.0
        %v1326 = vmax.f32 %v1198, 0.0
        %v1327 = vmax.f32 %v1199, 0.0
        %v1328 = vmax.f32 %v1200, 0.0
        %v1329 = vmax.f32 %v1201, 0.0
        %v1330 = vmax.f32 %v1202, 0.0
        %v1331 = vmax.f32 %v1203, 0.0
        %v1332 = vmax.f32 %v1204, 0.0
        %v1333 = vmax.f32 %v1205, 0.0
        %v1334 = vmax.f32 %v1206, 0.0
        %v1335 = vmax.f32 %v1207, 0.0
        %v1336 = vmax.f32 %v1208, 0.0
        %v1337 = vmax.f32 %v1209, 0.0
        %v1338 = vmax.f32 %v1210, 0.0
        %v1339 = vmax.f32 %v1211, 0.0
        %v1340 = vmax.f32 %v1212, 0.0
        %v1341 = vmax.f32 %v1213, 0.0
        %v1342 = vmax.f32 %v1214, 0.0
        %v1343 = vmax.f32 %v1215, 0.0
        %v1344 = vmax.f32 %v1216, 0.0
        %v1345 = vmax.f32 %v1217, 0.0
        %v1346 = vmax.f32 %v1218, 0.0
        %v1347 = vmax.f32 %v1219, 0.0
        %v1348 = vmax.f32 %v1220, 0.0
        %v1349 = vmax.f32 %v1221, 0.0
        %v1350 = vmax.f32 %v1222, 0.0
        %v1351 = vmax.f32 %v1223, 0.0
        %v1352 = vmax.f32 %v1224, 0.0
        %v1353 = vmax.f32 %v1225, 0.0
        %v1354 = vmax.f32 %v1226, 0.0
        %v1355 = vmax.f32 %v1227, 0.0
        %v1356 = vmax.f32 %v1228, 0.0
        %v1357 = vmax.f32 %v1229, 0.0
        %v1358 = vmax.f32 %v1230, 0.0
        %v1359 = vmax.f32 %v1231, 0.0
        %v1360 = vmax.f32 %v1232, 0.0
        %v1361 = vmax.f32 %v1233, 0.0
        %v1362 = vmax.f32 %v1234, 0.0
        %v1363 = vmax.f32 %v1235, 0.0
        %v1364 = vmax.f32 %v1236, 0.0
        %v1365 = vmax.f32 %v1237, 0.0
        %v1366 = vmax.f32 %v1238, 0.0
        %v1367 = vmax.f32 %v1239, 0.0
        %v1368 = vmax.f32 %v1240, 0.0
        %v1369 = vmax.f32 %v1241, 0.0
        %v1370 = vmax.f32 %v1242, 0.0
        %v1371 = vmax.f32 %v1243, 0.0
        %v1372 = vmax.f32 %v1244, 0.0
        %v1373 = vmax.f32 %v1245, 0.0
        %v1374 = vmax.f32 %v1246, 0.0
        %v1375 = vmax.f32 %v1247, 0.0
        %v1376 = vpack.c.bf16 %v1248, %v1248
        %v1377 = vpack.c.bf16 %v1249, %v1249
        %v1378 = vpack.c.bf16 %v1250, %v1250
        %v1379 = vpack.c.bf16 %v1251, %v1251
        %v1380 = vpack.c.bf16 %v1252, %v1252
        %v1381 = vpack.c.bf16 %v1253, %v1253
        %v1382 = vpack.c.bf16 %v1254, %v1254
        %v1383 = vpack.c.bf16 %v1255, %v1255
        %v1384 = vpack.c.bf16 %v1256, %v1256
        %v1385 = vpack.c.bf16 %v1257, %v1257
        %v1386 = vpack.c.bf16 %v1258, %v1258
        %v1387 = vpack.c.bf16 %v1259, %v1259
        %v1388 = vpack.c.bf16 %v1260, %v1260
        %v1389 = vpack.c.bf16 %v1261, %v1261
        %v1390 = vpack.c.bf16 %v1262, %v1262
        %v1391 = vpack.c.bf16 %v1263, %v1263
        %v1392 = vpack.c.bf16 %v1264, %v1264
        %v1393 = vpack.c.bf16 %v1265, %v1265
        %v1394 = vpack.c.bf16 %v1266, %v1266
        %v1395 = vpack.c.bf16 %v1267, %v1267
        %v1396 = vpack.c.bf16 %v1268, %v1268
        %v1397 = vpack.c.bf16 %v1269, %v1269
        %v1398 = vpack.c.bf16 %v1270, %v1270
        %v1399 = vpack.c.bf16 %v1271, %v1271
        %v1400 = vpack.c.bf16 %v1272, %v1272
        %v1401 = vpack.c.bf16 %v1273, %v1273
        %v1402 = vpack.c.bf16 %v1274, %v1274
        %v1403 = vpack.c.bf16 %v1275, %v1275
        %v1404 = vpack.c.bf16 %v1276, %v1276
        %v1405 = vpack.c.bf16 %v1277, %v1277
        %v1406 = vpack.c.bf16 %v1278, %v1278
        %v1407 = vpack.c.bf16 %v1279, %v1279
        %v1408 = vpack.c.bf16 %v1280, %v1280
        %v1409 = vpack.c.bf16 %v1281, %v1281
        %v1410 = vpack.c.bf16 %v1282, %v1282
        %v1411 = vpack.c.bf16 %v1283, %v1283
        %v1412 = vpack.c.bf16 %v1284, %v1284
        %v1413 = vpack.c.bf16 %v1285, %v1285
        %v1414 = vpack.c.bf16 %v1286, %v1286
        %v1415 = vpack.c.bf16 %v1287, %v1287
        %v1416 = vpack.c.bf16 %v1288, %v1288
        %v1417 = vpack.c.bf16 %v1289, %v1289
        %v1418 = vpack.c.bf16 %v1290, %v1290
        %v1419 = vpack.c.bf16 %v1291, %v1291
        %v1420 = vpack.c.bf16 %v1292, %v1292
        %v1421 = vpack.c.bf16 %v1293, %v1293
        %v1422 = vpack.c.bf16 %v1294, %v1294
        %v1423 = vpack.c.bf16 %v1295, %v1295
        %v1424 = vpack.c.bf16 %v1296, %v1296
        %v1425 = vpack.c.bf16 %v1297, %v1297
        %v1426 = vpack.c.bf16 %v1298, %v1298
        %v1427 = vpack.c.bf16 %v1299, %v1299
        %v1428 = vpack.c.bf16 %v1300, %v1300
        %v1429 = vpack.c.bf16 %v1301, %v1301
        %v1430 = vpack.c.bf16 %v1302, %v1302
        %v1431 = vpack.c.bf16 %v1303, %v1303
        %v1432 = vpack.c.bf16 %v1304, %v1304
        %v1433 = vpack.c.bf16 %v1305, %v1305
        %v1434 = vpack.c.bf16 %v1306, %v1306
        %v1435 = vpack.c.bf16 %v1307, %v1307
        %v1436 = vpack.c.bf16 %v1308, %v1308
        %v1437 = vpack.c.bf16 %v1309, %v1309
        %v1438 = vpack.c.bf16 %v1310, %v1310
        %v1439 = vpack.c.bf16 %v1311, %v1311
        %v1440 = vpack.c.bf16 %v1312, %v1312
        %v1441 = vpack.c.bf16 %v1313, %v1313
        %v1442 = vpack.c.bf16 %v1314, %v1314
        %v1443 = vpack.c.bf16 %v1315, %v1315
        %v1444 = vpack.c.bf16 %v1316, %v1316
        %v1445 = vpack.c.bf16 %v1317, %v1317
        %v1446 = vpack.c.bf16 %v1318, %v1318
        %v1447 = vpack.c.bf16 %v1319, %v1319
        %v1448 = vpack.c.bf16 %v1320, %v1320
        %v1449 = vpack.c.bf16 %v1321, %v1321
        %v1450 = vpack.c.bf16 %v1322, %v1322
        %v1451 = vpack.c.bf16 %v1323, %v1323
        %v1452 = vpack.c.bf16 %v1324, %v1324
        %v1453 = vpack.c.bf16 %v1325, %v1325
        %v1454 = vpack.c.bf16 %v1326, %v1326
        %v1455 = vpack.c.bf16 %v1327, %v1327
        %v1456 = vpack.c.bf16 %v1328, %v1328
        %v1457 = vpack.c.bf16 %v1329, %v1329
        %v1458 = vpack.c.bf16 %v1330, %v1330
        %v1459 = vpack.c.bf16 %v1331, %v1331
        %v1460 = vpack.c.bf16 %v1332, %v1332
        %v1461 = vpack.c.bf16 %v1333, %v1333
        %v1462 = vpack.c.bf16 %v1334, %v1334
        %v1463 = vpack.c.bf16 %v1335, %v1335
        %v1464 = vpack.c.bf16 %v1336, %v1336
        %v1465 = vpack.c.bf16 %v1337, %v1337
        %v1466 = vpack.c.bf16 %v1338, %v1338
        %v1467 = vpack.c.bf16 %v1339, %v1339
        %v1468 = vpack.c.bf16 %v1340, %v1340
        %v1469 = vpack.c.bf16 %v1341, %v1341
        %v1470 = vpack.c.bf16 %v1342, %v1342
        %v1471 = vpack.c.bf16 %v1343, %v1343
        %v1472 = vpack.c.bf16 %v1344, %v1344
        %v1473 = vpack.c.bf16 %v1345, %v1345
        %v1474 = vpack.c.bf16 %v1346, %v1346
        %v1475 = vpack.c.bf16 %v1347, %v1347
        %v1476 = vpack.c.bf16 %v1348, %v1348
        %v1477 = vpack.c.bf16 %v1349, %v1349
        %v1478 = vpack.c.bf16 %v1350, %v1350
        %v1479 = vpack.c.bf16 %v1351, %v1351
        %v1480 = vpack.c.bf16 %v1352, %v1352
        %v1481 = vpack.c.bf16 %v1353, %v1353
        %v1482 = vpack.c.bf16 %v1354, %v1354
        %v1483 = vpack.c.bf16 %v1355, %v1355
        %v1484 = vpack.c.bf16 %v1356, %v1356
        %v1485 = vpack.c.bf16 %v1357, %v1357
        %v1486 = vpack.c.bf16 %v1358, %v1358
        %v1487 = vpack.c.bf16 %v1359, %v1359
        %v1488 = vpack.c.bf16 %v1360, %v1360
        %v1489 = vpack.c.bf16 %v1361, %v1361
        %v1490 = vpack.c.bf16 %v1362, %v1362
        %v1491 = vpack.c.bf16 %v1363, %v1363
        %v1492 = vpack.c.bf16 %v1364, %v1364
        %v1493 = vpack.c.bf16 %v1365, %v1365
        %v1494 = vpack.c.bf16 %v1366, %v1366
        %v1495 = vpack.c.bf16 %v1367, %v1367
        %v1496 = vpack.c.bf16 %v1368, %v1368
        %v1497 = vpack.c.bf16 %v1369, %v1369
        %v1498 = vpack.c.bf16 %v1370, %v1370
        %v1499 = vpack.c.bf16 %v1371, %v1371
        %v1500 = vpack.c.bf16 %v1372, %v1372
        %v1501 = vpack.c.bf16 %v1373, %v1373
        %v1502 = vpack.c.bf16 %v1374, %v1374
        %v1503 = vpack.c.bf16 %v1375, %v1375
        %vm1504 = vcmask 24576
        %1505 = vst.msk [vmem:[%s731] sm:$0x1] %vm1504, %v1376
        %1506 = vst.msk [vmem:[%s731 + $0x1] sm:$0x1] %vm1504, %v1377
        %1507 = vst.msk [vmem:[%s731 + $0x2] sm:$0x1] %vm1504, %v1378
        %1508 = vst.msk [vmem:[%s731 + $0x3] sm:$0x1] %vm1504, %v1379
        %1509 = vst.msk [vmem:[%s731 + $0x4] sm:$0x1] %vm1504, %v1380
        %1510 = vst.msk [vmem:[%s731 + $0x5] sm:$0x1] %vm1504, %v1381
        %1511 = vst.msk [vmem:[%s731 + $0x6] sm:$0x1] %vm1504, %v1382
        %1512 = vst.msk [vmem:[%s731 + $0x7] sm:$0x1] %vm1504, %v1383
        %1513 = vst.msk [vmem:[%s731 + $0x8] sm:$0x1] %vm1504, %v1384
        %1514 = vst.msk [vmem:[%s731 + $0x9] sm:$0x1] %vm1504, %v1385
        %1515 = vst.msk [vmem:[%s731 + $0xa] sm:$0x1] %vm1504, %v1386
        %1516 = vst.msk [vmem:[%s731 + $0xb] sm:$0x1] %vm1504, %v1387
        %1517 = vst.msk [vmem:[%s731 + $0xc] sm:$0x1] %vm1504, %v1388
        %1518 = vst.msk [vmem:[%s731 + $0xd] sm:$0x1] %vm1504, %v1389
        %1519 = vst.msk [vmem:[%s731 + $0xe] sm:$0x1] %vm1504, %v1390
        %1520 = vst.msk [vmem:[%s731 + $0xf] sm:$0x1] %vm1504, %v1391
        %1521 = vst.msk [vmem:[%s731 + $0x10] sm:$0x1] %vm1504, %v1392
        %1522 = vst.msk [vmem:[%s731 + $0x11] sm:$0x1] %vm1504, %v1393
        %1523 = vst.msk [vmem:[%s731 + $0x12] sm:$0x1] %vm1504, %v1394
        %1524 = vst.msk [vmem:[%s731 + $0x13] sm:$0x1] %vm1504, %v1395
        %1525 = vst.msk [vmem:[%s731 + $0x14] sm:$0x1] %vm1504, %v1396
        %1526 = vst.msk [vmem:[%s731 + $0x15] sm:$0x1] %vm1504, %v1397
        %1527 = vst.msk [vmem:[%s731 + $0x16] sm:$0x1] %vm1504, %v1398
        %1528 = vst.msk [vmem:[%s731 + $0x17] sm:$0x1] %vm1504, %v1399
        %1529 = vst.msk [vmem:[%s731 + $0x18] sm:$0x1] %vm1504, %v1400
        %1530 = vst.msk [vmem:[%s731 + $0x19] sm:$0x1] %vm1504, %v1401
        %1531 = vst.msk [vmem:[%s731 + $0x1a] sm:$0x1] %vm1504, %v1402
        %1532 = vst.msk [vmem:[%s731 + $0x1b] sm:$0x1] %vm1504, %v1403
        %1533 = vst.msk [vmem:[%s731 + $0x1c] sm:$0x1] %vm1504, %v1404
        %1534 = vst.msk [vmem:[%s731 + $0x1d] sm:$0x1] %vm1504, %v1405
        %1535 = vst.msk [vmem:[%s731 + $0x1e] sm:$0x1] %vm1504, %v1406
        %1536 = vst.msk [vmem:[%s731 + $0x1f] sm:$0x1] %vm1504, %v1407
        %1537 = vst.msk [vmem:[%s731 + $0x20] sm:$0x1] %vm1504, %v1408
        %1538 = vst.msk [vmem:[%s731 + $0x21] sm:$0x1] %vm1504, %v1409
        %1539 = vst.msk [vmem:[%s731 + $0x22] sm:$0x1] %vm1504, %v1410
        %1540 = vst.msk [vmem:[%s731 + $0x23] sm:$0x1] %vm1504, %v1411
        %1541 = vst.msk [vmem:[%s731 + $0x24] sm:$0x1] %vm1504, %v1412
        %1542 = vst.msk [vmem:[%s731 + $0x25] sm:$0x1] %vm1504, %v1413
        %1543 = vst.msk [vmem:[%s731 + $0x26] sm:$0x1] %vm1504, %v1414
        %1544 = vst.msk [vmem:[%s731 + $0x27] sm:$0x1] %vm1504, %v1415
        %1545 = vst.msk [vmem:[%s731 + $0x28] sm:$0x1] %vm1504, %v1416
        %1546 = vst.msk [vmem:[%s731 + $0x29] sm:$0x1] %vm1504, %v1417
        %1547 = vst.msk [vmem:[%s731 + $0x2a] sm:$0x1] %vm1504, %v1418
        %1548 = vst.msk [vmem:[%s731 + $0x2b] sm:$0x1] %vm1504, %v1419
        %1549 = vst.msk [vmem:[%s731 + $0x2c] sm:$0x1] %vm1504, %v1420
        %1550 = vst.msk [vmem:[%s731 + $0x2d] sm:$0x1] %vm1504, %v1421
        %1551 = vst.msk [vmem:[%s731 + $0x2e] sm:$0x1] %vm1504, %v1422
        %1552 = vst.msk [vmem:[%s731 + $0x2f] sm:$0x1] %vm1504, %v1423
        %1553 = vst.msk [vmem:[%s731 + $0x30] sm:$0x1] %vm1504, %v1424
        %1554 = vst.msk [vmem:[%s731 + $0x31] sm:$0x1] %vm1504, %v1425
        %1555 = vst.msk [vmem:[%s731 + $0x32] sm:$0x1] %vm1504, %v1426
        %1556 = vst.msk [vmem:[%s731 + $0x33] sm:$0x1] %vm1504, %v1427
        %1557 = vst.msk [vmem:[%s731 + $0x34] sm:$0x1] %vm1504, %v1428
        %1558 = vst.msk [vmem:[%s731 + $0x35] sm:$0x1] %vm1504, %v1429
        %1559 = vst.msk [vmem:[%s731 + $0x36] sm:$0x1] %vm1504, %v1430
        %1560 = vst.msk [vmem:[%s731 + $0x37] sm:$0x1] %vm1504, %v1431
        %1561 = vst.msk [vmem:[%s731 + $0x38] sm:$0x1] %vm1504, %v1432
        %1562 = vst.msk [vmem:[%s731 + $0x39] sm:$0x1] %vm1504, %v1433
        %1563 = vst.msk [vmem:[%s731 + $0x3a] sm:$0x1] %vm1504, %v1434
        %1564 = vst.msk [vmem:[%s731 + $0x3b] sm:$0x1] %vm1504, %v1435
        %1565 = vst.msk [vmem:[%s731 + $0x3c] sm:$0x1] %vm1504, %v1436
        %1566 = vst.msk [vmem:[%s731 + $0x3d] sm:$0x1] %vm1504, %v1437
        %1567 = vst.msk [vmem:[%s731 + $0x3e] sm:$0x1] %vm1504, %v1438
        %1568 = vst.msk [vmem:[%s731 + $0x3f] sm:$0x1] %vm1504, %v1439
        %1569 = vst.msk [vmem:[%s731 + $0x40] sm:$0x1] %vm1504, %v1440
        %1570 = vst.msk [vmem:[%s731 + $0x41] sm:$0x1] %vm1504, %v1441
        %1571 = vst.msk [vmem:[%s731 + $0x42] sm:$0x1] %vm1504, %v1442
        %1572 = vst.msk [vmem:[%s731 + $0x43] sm:$0x1] %vm1504, %v1443
        %1573 = vst.msk [vmem:[%s731 + $0x44] sm:$0x1] %vm1504, %v1444
        %1574 = vst.msk [vmem:[%s731 + $0x45] sm:$0x1] %vm1504, %v1445
        %1575 = vst.msk [vmem:[%s731 + $0x46] sm:$0x1] %vm1504, %v1446
        %1576 = vst.msk [vmem:[%s731 + $0x47] sm:$0x1] %vm1504, %v1447
        %1577 = vst.msk [vmem:[%s731 + $0x48] sm:$0x1] %vm1504, %v1448
        %1578 = vst.msk [vmem:[%s731 + $0x49] sm:$0x1] %vm1504, %v1449
        %1579 = vst.msk [vmem:[%s731 + $0x4a] sm:$0x1] %vm1504, %v1450
        %1580 = vst.msk [vmem:[%s731 + $0x4b] sm:$0x1] %vm1504, %v1451
        %1581 = vst.msk [vmem:[%s731 + $0x4c] sm:$0x1] %vm1504, %v1452
        %1582 = vst.msk [vmem:[%s731 + $0x4d] sm:$0x1] %vm1504, %v1453
        %1583 = vst.msk [vmem:[%s731 + $0x4e] sm:$0x1] %vm1504, %v1454
        %1584 = vst.msk [vmem:[%s731 + $0x4f] sm:$0x1] %vm1504, %v1455
        %1585 = vst.msk [vmem:[%s731 + $0x50] sm:$0x1] %vm1504, %v1456
        %1586 = vst.msk [vmem:[%s731 + $0x51] sm:$0x1] %vm1504, %v1457
        %1587 = vst.msk [vmem:[%s731 + $0x52] sm:$0x1] %vm1504, %v1458
        %1588 = vst.msk [vmem:[%s731 + $0x53] sm:$0x1] %vm1504, %v1459
        %1589 = vst.msk [vmem:[%s731 + $0x54] sm:$0x1] %vm1504, %v1460
        %1590 = vst.msk [vmem:[%s731 + $0x55] sm:$0x1] %vm1504, %v1461
        %1591 = vst.msk [vmem:[%s731 + $0x56] sm:$0x1] %vm1504, %v1462
        %1592 = vst.msk [vmem:[%s731 + $0x57] sm:$0x1] %vm1504, %v1463
        %1593 = vst.msk [vmem:[%s731 + $0x58] sm:$0x1] %vm1504, %v1464
        %1594 = vst.msk [vmem:[%s731 + $0x59] sm:$0x1] %vm1504, %v1465
        %1595 = vst.msk [vmem:[%s731 + $0x5a] sm:$0x1] %vm1504, %v1466
        %1596 = vst.msk [vmem:[%s731 + $0x5b] sm:$0x1] %vm1504, %v1467
        %1597 = vst.msk [vmem:[%s731 + $0x5c] sm:$0x1] %vm1504, %v1468
        %1598 = vst.msk [vmem:[%s731 + $0x5d] sm:$0x1] %vm1504, %v1469
        %1599 = vst.msk [vmem:[%s731 + $0x5e] sm:$0x1] %vm1504, %v1470
        %1600 = vst.msk [vmem:[%s731 + $0x5f] sm:$0x1] %vm1504, %v1471
        %1601 = vst.msk [vmem:[%s731 + $0x60] sm:$0x1] %vm1504, %v1472
        %1602 = vst.msk [vmem:[%s731 + $0x61] sm:$0x1] %vm1504, %v1473
        %1603 = vst.msk [vmem:[%s731 + $0x62] sm:$0x1] %vm1504, %v1474
        %1604 = vst.msk [vmem:[%s731 + $0x63] sm:$0x1] %vm1504, %v1475
        %1605 = vst.msk [vmem:[%s731 + $0x64] sm:$0x1] %vm1504, %v1476
        %1606 = vst.msk [vmem:[%s731 + $0x65] sm:$0x1] %vm1504, %v1477
        %1607 = vst.msk [vmem:[%s731 + $0x66] sm:$0x1] %vm1504, %v1478
        %1608 = vst.msk [vmem:[%s731 + $0x67] sm:$0x1] %vm1504, %v1479
        %1609 = vst.msk [vmem:[%s731 + $0x68] sm:$0x1] %vm1504, %v1480
        %1610 = vst.msk [vmem:[%s731 + $0x69] sm:$0x1] %vm1504, %v1481
        %1611 = vst.msk [vmem:[%s731 + $0x6a] sm:$0x1] %vm1504, %v1482
        %1612 = vst.msk [vmem:[%s731 + $0x6b] sm:$0x1] %vm1504, %v1483
        %1613 = vst.msk [vmem:[%s731 + $0x6c] sm:$0x1] %vm1504, %v1484
        %1614 = vst.msk [vmem:[%s731 + $0x6d] sm:$0x1] %vm1504, %v1485
        %1615 = vst.msk [vmem:[%s731 + $0x6e] sm:$0x1] %vm1504, %v1486
        %1616 = vst.msk [vmem:[%s731 + $0x6f] sm:$0x1] %vm1504, %v1487
        %1617 = vst.msk [vmem:[%s731 + $0x70] sm:$0x1] %vm1504, %v1488
        %1618 = vst.msk [vmem:[%s731 + $0x71] sm:$0x1] %vm1504, %v1489
        %1619 = vst.msk [vmem:[%s731 + $0x72] sm:$0x1] %vm1504, %v1490
        %1620 = vst.msk [vmem:[%s731 + $0x73] sm:$0x1] %vm1504, %v1491
        %1621 = vst.msk [vmem:[%s731 + $0x74] sm:$0x1] %vm1504, %v1492
        %1622 = vst.msk [vmem:[%s731 + $0x75] sm:$0x1] %vm1504, %v1493
        %1623 = vst.msk [vmem:[%s731 + $0x76] sm:$0x1] %vm1504, %v1494
        %1624 = vst.msk [vmem:[%s731 + $0x77] sm:$0x1] %vm1504, %v1495
        %1625 = vst.msk [vmem:[%s731 + $0x78] sm:$0x1] %vm1504, %v1496
        %1626 = vst.msk [vmem:[%s731 + $0x79] sm:$0x1] %vm1504, %v1497
        %1627 = vst.msk [vmem:[%s731 + $0x7a] sm:$0x1] %vm1504, %v1498
        %1628 = vst.msk [vmem:[%s731 + $0x7b] sm:$0x1] %vm1504, %v1499
        %1629 = vst.msk [vmem:[%s731 + $0x7c] sm:$0x1] %vm1504, %v1500
        %1630 = vst.msk [vmem:[%s731 + $0x7d] sm:$0x1] %vm1504, %v1501
        %1631 = vst.msk [vmem:[%s731 + $0x7e] sm:$0x1] %vm1504, %v1502
        %1632 = vst.msk [vmem:[%s731 + $0x7f] sm:$0x1] %vm1504, %v1503
        %s1633 = sand.u32 %s106, 1
        %s1634 = sand.u32 %s106, 1
        %s1635 = smul.addr %s1634, 128
        %s1636 = scalar_lea.vmem [#allocation3], %s1635
        // Predicated region
        $region74: #{unet_decoder_forward.3} parent=68 // pred_check
          %p1637 = pneg %p116
        $region75: #{unet_decoder_forward.3} parent=68 // pred_check_branch
          %1639 = sbr.rel (%p1637) target = $region77
        $region76: #{unet_decoder_forward.3} parent=68 // pred_region
          %s1640 = smul.u32 16, %s18
          %s1641 = smul.addr %s19, 8
          %s1642 = smul.addr %s1640, 16
          %s1643 = sadd.s32 %s1641, %s1642
          %s1644 = scalar_lea.vmem %s3, %s1643
          // Predicated region
          $region78: #{unet_decoder_forward.3} parent=76 // pred_check
            _
          $region79: #{unet_decoder_forward.3} parent=76 // pred_check_branch
            %1646 = sbr.rel (0) target = $region81
          $region80: #{unet_decoder_forward.3} parent=76 // pred_region
            // Predicated region
            $region82: #{unet_decoder_forward.3} parent=80 // pred_check
              _
            $region83: #{unet_decoder_forward.3} parent=80 // pred_check_branch
              %1648 = sbr.rel (0) target = $region85
            $region84: #{unet_decoder_forward.3} parent=80 // pred_region
              // Predicated region
              $region97: #{unet_decoder_forward.3} parent=84 // pred_check
                _
              $region98: #{unet_decoder_forward.3} parent=84 // pred_check_branch
                %1693 = sbr.rel (0) target = $region100
              $region99: #{unet_decoder_forward.3} parent=84 // pred_region
                loop: start=0, step=1, limit=1
                $region101: #{unet_decoder_forward.3} parent=99 // loop_pre_header
                  _
                $region102: #{unet_decoder_forward.3} parent=99 // loop_header
                  %s1695 = sphi 0, %s1699
                  %p1696 = scmp.ge.s32.totalorder %s1695, 1
                  %s1700 = sphi %s1636, %s1636
                  %s1701 = sphi %s1644, %s1644
                $region103: #{unet_decoder_forward.3} parent=99 // loop_header_branch
                  %1698 = sbr.rel (%p1696) target = $region107
                $region104: #{unet_decoder_forward.3} parent=99 // loop_body
                  %v1702 = vld [vmem:[%s1700] sm:$0xff]
                  %1703 = vst [vmem:[%s1701] sm:$0xff] %v1702
                  %v1704 = vld [vmem:[%s1700 + $0x8] sm:$0xff]
                  %1705 = vst [vmem:[%s1701 + $0x10] sm:$0xff] %v1704
                  %v1706 = vld [vmem:[%s1700 + $0x10] sm:$0xff]
                  %1707 = vst [vmem:[%s1701 + $0x20] sm:$0xff] %v1706
                  %v1708 = vld [vmem:[%s1700 + $0x18] sm:$0xff]
                  %1709 = vst [vmem:[%s1701 + $0x30] sm:$0xff] %v1708
                  %v1710 = vld [vmem:[%s1700 + $0x20] sm:$0xff]
                  %1711 = vst [vmem:[%s1701 + $0x40] sm:$0xff] %v1710
                  %v1712 = vld [vmem:[%s1700 + $0x28] sm:$0xff]
                  %1713 = vst [vmem:[%s1701 + $0x50] sm:$0xff] %v1712
                  %v1714 = vld [vmem:[%s1700 + $0x30] sm:$0xff]
                  %1715 = vst [vmem:[%s1701 + $0x60] sm:$0xff] %v1714
                  %v1716 = vld [vmem:[%s1700 + $0x38] sm:$0xff]
                  %1717 = vst [vmem:[%s1701 + $0x70] sm:$0xff] %v1716
                  %v1718 = vld [vmem:[%s1700 + $0x40] sm:$0xff]
                  %1719 = vst [vmem:[%s1701 + $0x80] sm:$0xff] %v1718
                  %v1720 = vld [vmem:[%s1700 + $0x48] sm:$0xff]
                  %1721 = vst [vmem:[%s1701 + $0x90] sm:$0xff] %v1720
                  %v1722 = vld [vmem:[%s1700 + $0x50] sm:$0xff]
                  %1723 = vst [vmem:[%s1701 + $0xa0] sm:$0xff] %v1722
                  %v1724 = vld [vmem:[%s1700 + $0x58] sm:$0xff]
                  %1725 = vst [vmem:[%s1701 + $0xb0] sm:$0xff] %v1724
                  %v1726 = vld [vmem:[%s1700 + $0x60] sm:$0xff]
                  %1727 = vst [vmem:[%s1701 + $0xc0] sm:$0xff] %v1726
                  %v1728 = vld [vmem:[%s1700 + $0x68] sm:$0xff]
                  %1729 = vst [vmem:[%s1701 + $0xd0] sm:$0xff] %v1728
                  %v1730 = vld [vmem:[%s1700 + $0x70] sm:$0xff]
                  %1731 = vst [vmem:[%s1701 + $0xe0] sm:$0xff] %v1730
                  %v1732 = vld [vmem:[%s1700 + $0x78] sm:$0xff]
                  %1733 = vst [vmem:[%s1701 + $0xf0] sm:$0xff] %v1732
                $region105: #{unet_decoder_forward.3} parent=99 // loop_footer
                  %s1699 = sadd.s32 1, %s1695
                $region106: #{unet_decoder_forward.3} parent=99 // loop_footer_branch
                  %1694 = sbr.rel target = $region102
                $region107: #{unet_decoder_forward.3} parent=99 // loop_exit
                  _
              $region100: #{unet_decoder_forward.3} parent=84 // pred_fallthru
                _
              // Predicated region
              $region108: #{unet_decoder_forward.3} parent=84 // pred_check
                _
              $region109: #{unet_decoder_forward.3} parent=84 // pred_check_branch
                %1735 = sbr.rel target = $region111
              $region110: #{unet_decoder_forward.3} parent=84 // pred_region
                _
              $region111: #{unet_decoder_forward.3} parent=84 // pred_fallthru
                _
            $region85: #{unet_decoder_forward.3} parent=80 // pred_fallthru
              _
            // Predicated region
            $region86: #{unet_decoder_forward.3} parent=80 // pred_check
              _
            $region87: #{unet_decoder_forward.3} parent=80 // pred_check_branch
              %1650 = sbr.rel target = $region89
            $region88: #{unet_decoder_forward.3} parent=80 // pred_region
              loop: start=0, step=1, limit=1
              $region90: #{unet_decoder_forward.3} parent=88 // loop_pre_header
                _
              $region91: #{unet_decoder_forward.3} parent=88 // loop_header
                %s1653 = sphi 0, %s1657
                %p1654 = scmp.ge.s32.totalorder %s1653, 1
                %s1658 = sphi %s1636, %s1636
                %s1659 = sphi %s1644, %s1644
              $region92: #{unet_decoder_forward.3} parent=88 // loop_header_branch
                %1656 = sbr.rel (%p1654) target = $region96
              $region93: #{unet_decoder_forward.3} parent=88 // loop_body
                %v1660 = vld [vmem:[%s1658] sm:$0xff]
                %1661 = vst [vmem:[%s1659] sm:$0xff] %v1660
                %v1662 = vld [vmem:[%s1658 + $0x8] sm:$0xff]
                %1663 = vst [vmem:[%s1659 + $0x10] sm:$0xff] %v1662
                %v1664 = vld [vmem:[%s1658 + $0x10] sm:$0xff]
                %1665 = vst [vmem:[%s1659 + $0x20] sm:$0xff] %v1664
                %v1666 = vld [vmem:[%s1658 + $0x18] sm:$0xff]
                %1667 = vst [vmem:[%s1659 + $0x30] sm:$0xff] %v1666
                %v1668 = vld [vmem:[%s1658 + $0x20] sm:$0xff]
                %1669 = vst [vmem:[%s1659 + $0x40] sm:$0xff] %v1668
                %v1670 = vld [vmem:[%s1658 + $0x28] sm:$0xff]
                %1671 = vst [vmem:[%s1659 + $0x50] sm:$0xff] %v1670
                %v1672 = vld [vmem:[%s1658 + $0x30] sm:$0xff]
                %1673 = vst [vmem:[%s1659 + $0x60] sm:$0xff] %v1672
                %v1674 = vld [vmem:[%s1658 + $0x38] sm:$0xff]
                %1675 = vst [vmem:[%s1659 + $0x70] sm:$0xff] %v1674
                %v1676 = vld [vmem:[%s1658 + $0x40] sm:$0xff]
                %1677 = vst [vmem:[%s1659 + $0x80] sm:$0xff] %v1676
                %v1678 = vld [vmem:[%s1658 + $0x48] sm:$0xff]
                %1679 = vst [vmem:[%s1659 + $0x90] sm:$0xff] %v1678
                %v1680 = vld [vmem:[%s1658 + $0x50] sm:$0xff]
                %1681 = vst [vmem:[%s1659 + $0xa0] sm:$0xff] %v1680
                %v1682 = vld [vmem:[%s1658 + $0x58] sm:$0xff]
                %1683 = vst [vmem:[%s1659 + $0xb0] sm:$0xff] %v1682
                %v1684 = vld [vmem:[%s1658 + $0x60] sm:$0xff]
                %1685 = vst [vmem:[%s1659 + $0xc0] sm:$0xff] %v1684
                %v1686 = vld [vmem:[%s1658 + $0x68] sm:$0xff]
                %1687 = vst [vmem:[%s1659 + $0xd0] sm:$0xff] %v1686
                %v1688 = vld [vmem:[%s1658 + $0x70] sm:$0xff]
                %1689 = vst [vmem:[%s1659 + $0xe0] sm:$0xff] %v1688
                %v1690 = vld [vmem:[%s1658 + $0x78] sm:$0xff]
                %1691 = vst [vmem:[%s1659 + $0xf0] sm:$0xff] %v1690
              $region94: #{unet_decoder_forward.3} parent=88 // loop_footer
                %s1657 = sadd.s32 1, %s1653
              $region95: #{unet_decoder_forward.3} parent=88 // loop_footer_branch
                %1652 = sbr.rel target = $region91
              $region96: #{unet_decoder_forward.3} parent=88 // loop_exit
                _
            $region89: #{unet_decoder_forward.3} parent=80 // pred_fallthru
              _
          $region81: #{unet_decoder_forward.3} parent=76 // pred_fallthru
            _
          %1736 = vnop
        $region77: #{unet_decoder_forward.3} parent=68 // pred_fallthru
          _
      $region69: #{unet_decoder_forward.3} parent=5 // pred_fallthru
        _
      %p1737 = scmp.le.s32.totalorder 2, %s9
      // Predicated region
      $region112: #{unet_decoder_forward.3} parent=5 // pred_check
        %p1738 = pneg %p1737
      $region113: #{unet_decoder_forward.3} parent=5 // pred_check_branch
        %1740 = sbr.rel (%p1738) target = $region115
      $region114: #{unet_decoder_forward.3} parent=5 // pred_region
        %s1741 = ssub.s32 %s9, 2
        // Predicated region
        $region116: #{unet_decoder_forward.3} parent=114 // pred_check
          %p1742 = pneg %p122
        $region117: #{unet_decoder_forward.3} parent=114 // pred_check_branch
          %1744 = sbr.rel (%p1742) target = $region119
        $region118: #{unet_decoder_forward.3} parent=114 // pred_region
          %s1745 = sand.u32 %s107, 1
          %s1746 = sand.u32 %s107, 1
          %s1747 = smul.addr %s1746, 128
          %s1748 = scalar_lea.vmem [#allocation3], %s1747
        $region119: #{unet_decoder_forward.3} parent=114 // pred_fallthru
          _
      $region115: #{unet_decoder_forward.3} parent=5 // pred_fallthru
        _
    $region6: #{unet_decoder_forward.3} parent=1 // loop_footer
      %s13 = sadd.s32 1, %s9
    $region7: #{unet_decoder_forward.3} parent=1 // loop_footer_branch
      %8 = sbr.rel target = $region3
    $region8: #{unet_decoder_forward.3} parent=1 // loop_exit
      _

</llo_original>
